<compile_context>
chip_gen: v7x
topology: tpu7x:2x2x1
jax: 0.10.0
libtpu: 0.0.40
codegen_flags: <defaults>
</compile_context>

<pallas_src>
import functools

import numpy as np
import jax
import jax.numpy as jnp
from jax import lax
from jax.experimental import pallas as pl
from jax.experimental.pallas import tpu as pltpu


# --------------------------------------------------------------------------- #
# Kernel
# --------------------------------------------------------------------------- #
def _hswish(y):
    return y * (jnp.clip(y + 3.0, 0.0, 6.0) * (1.0 / 6.0))


def space_fused_kernel(x_ref,
                       dw0_ref, pw0_ref, pb0_ref,
                       dw2_ref, pw2_ref, pb2_ref,
                       w1_ref, b1_ref, wh_ref, bh_ref, ww_ref, bw_ref,
                       mask_ref, poolh_ref, poolw_ref, exph_ref, expw_ref,
                       o_ref, *, W):
    f32 = jnp.float32
    # f32 VPU math everywhere (safe on v5e which has no bf16 VALU).
    # TODO(synk): on v6e/v7x the bf16 path could skip this upcast to shrink the
    # live footprint; kept f32 for cross-generation safety.
    x = x_ref[...].astype(f32)                       # (TN, C, P)
    P = x.shape[-1]

    masks = mask_ref[...]                            # (4, 1, P) f32 border masks
    m_cl, m_cr, m_rt, m_rb = masks[0], masks[1], masks[2], masks[3]

    def dw3x3(v, dw_ref):
        """Depthwise 3x3 'same' conv on the flattened H*W lane axis."""
        dw = dw_ref[...]                             # (9, C, 1) f32 taps
        # Column-shifted (dx = -1 / +1) operands, zeroed at the W borders.
        # Shared by all three kernel rows (2 rolls + 2 mask-muls total).
        s_m = pltpu.roll(v, shift=1, axis=2) * m_cl          # v[.., p-1]
        s_p = pltpu.roll(v, shift=P - 1, axis=2) * m_cr      # v[.., p+1]

        def krow(i, a_m, a_0, a_p):
            return dw[3 * i] * a_m + dw[3 * i + 1] * a_0 + dw[3 * i + 2] * a_p

        out = krow(1, s_m, v, s_p)                                     # dy = 0
        out = out + m_rt * krow(0,                                     # dy = -1
                                pltpu.roll(s_m, shift=W, axis=2),
                                pltpu.roll(v, shift=W, axis=2),
                                pltpu.roll(s_p, shift=W, axis=2))
        out = out + m_rb * krow(2,                                     # dy = +1
                                pltpu.roll(s_m, shift=P - W, axis=2),
                                pltpu.roll(v, shift=P - W, axis=2),
                                pltpu.roll(s_p, shift=P - W, axis=2))
        return out

    def conv1x1(v, w_ref, b_ref):
        """out[n,o,l] = sum_k w[o,k] v[n,k,l] + b[o]; f32 MXU accumulation."""
        w = w_ref[...]                               # (O, K), pre-cast mm dtype
        wb = jnp.broadcast_to(w[None], (v.shape[0],) + w.shape)
        out = lax.dot_general(wb, v.astype(w.dtype),
                              (((2,), (1,)), ((0,), (0,))),
                              preferred_element_type=f32)
        return out + b_ref[...]                      # (O, 1) f32 bias broadcasts

    def lane_mm(v, m_ref):
        """Contract the lane axis of v (n,c,L1) with a constant (L1,L2)."""
        return lax.dot_general(v, m_ref[...], (((2,), (0,)), ((), ())),
                               preferred_element_type=f32)

    # ---- conv0 / conv2: depthwise 3x3 -> 1x1 (+folded BN) -> ReLU -----------
    x1 = jnp.maximum(conv1x1(dw3x3(x, dw0_ref), pw0_ref, pb0_ref), 0.0)
    x2 = jnp.maximum(conv1x1(dw3x3(x1, dw2_ref), pw2_ref, pb2_ref), 0.0)

    # ---- CoordAtt ------------------------------------------------------------
    xh = lane_mm(x2, poolh_ref)                      # (TN, C, H)  mean over W
    xw = lane_mm(x2, poolw_ref)                      # (TN, C, W)  mean over H
    yh = _hswish(conv1x1(xh, w1_ref, b1_ref))        # (TN, mip, H)
    yw = _hswish(conv1x1(xw, w1_ref, b1_ref))        # (TN, mip, W)
    ah = jax.nn.sigmoid(conv1x1(yh, wh_ref, bh_ref))   # (TN, C, H)
    aw = jax.nn.sigmoid(conv1x1(yw, ww_ref, bw_ref))   # (TN, C, W)
    gate = lane_mm(ah, exph_ref) * lane_mm(aw, expw_ref)   # (TN, C, P)

    o_ref[...] = (x2 * gate).astype(o_ref.dtype)


# --------------------------------------------------------------------------- #
# Wrapper
# --------------------------------------------------------------------------- #
def _const_spec(arr):
    zeros = (0,) * arr.ndim
    return pl.BlockSpec(arr.shape, lambda n, _z=zeros: _z)


def _vmem_capacity_bytes():
    try:
        cap = int(getattr(pltpu.get_tpu_info(), "vmem_capacity_bytes"))
        if cap > 0:
            return cap
    except Exception:
        pass
    return 64 * 1024 * 1024        # conservative default (v7x per-TC VMEM)


def _pick_tn(n, per_image_bytes, budget_bytes):
    """Largest batch block fitting the budget, keeping >=2 grid steps (2 TCs)."""
    best = 1
    for tn in range(1, n + 1):
        if tn * per_image_bytes > budget_bytes:
            break
        if n >= 2 and -(-n // tn) < 2:
            continue
        best = tn
    return best


def space_forward_pallas(x_nchw, params):
    N, C, H, Wd = x_nchw.shape
    P = H * Wd
    io_dtype = x_nchw.dtype
    f32 = jnp.float32
    mm_dtype = jnp.bfloat16 if io_dtype == jnp.bfloat16 else jnp.float32
    # TODO(synk): bf16 MXU operands could also be used for f32 I/O once C is
    # large enough that the 1x1-conv FLOPs matter; kept f32 here for accuracy.

    # ---- fold eval-mode BatchNorms into the adjacent 1x1 convs --------------
    def fold_pw(w_oi, b_o, bn):
        scale = bn["gamma"] / jnp.sqrt(bn["var"] + bn["eps"])
        shift = bn["beta"] - bn["mean"] * scale
        w = w_oi * scale[:, None]                            # (O, I)
        b = b_o * scale + shift                              # (O,)
        return w.astype(mm_dtype), b.reshape(-1, 1).astype(f32)

    pw0_w, pw0_b = fold_pw(params["pw0_w"], params["pw0_b"], params["bn0"])
    pw2_w, pw2_b = fold_pw(params["pw2_w"], params["pw2_b"], params["bn2"])
    w1, b1 = fold_pw(params["ca_w1"], params["ca_b1"], params["bn1"])
    wh = params["ca_wh"].astype(mm_dtype)                    # (C, mip)
    bh = params["ca_bh"].reshape(-1, 1).astype(f32)
    ww = params["ca_ww"].astype(mm_dtype)
    bw = params["ca_bw"].reshape(-1, 1).astype(f32)
    dw0 = params["dw0"].reshape(C, 9).T.reshape(9, C, 1).astype(f32)
    dw2 = params["dw2"].reshape(C, 9).T.reshape(9, C, 1).astype(f32)
    mip = w1.shape[0]

    # ---- constant masks / pooling / expansion matrices ----------------------
    rows = np.arange(P) // Wd
    cols = np.arange(P) % Wd
    masks = np.stack([(cols != 0), (cols != Wd - 1),
                      (rows != 0), (rows != H - 1)]).astype(np.float32)
    masks = jnp.asarray(masks.reshape(4, 1, P))
    poolh = jnp.asarray(((rows[:, None] == np.arange(H)[None, :]) / Wd)
                        .astype(np.float32))                 # (P, H) mean over W
    poolw = jnp.asarray(((cols[:, None] == np.arange(Wd)[None, :]) / H)
                        .astype(np.float32))                 # (P, W) mean over H
    exph = jnp.asarray((np.arange(H)[:, None] == rows[None, :])
                       .astype(np.float32))                  # (H, P)
    expw = jnp.asarray((np.arange(Wd)[:, None] == cols[None, :])
                       .astype(np.float32))                  # (W, P)

    # ---- free layout change: (N,C,H,W) -> (N,C,H*W) -------------------------
    x3 = x_nchw.reshape(N, C, P)

    # ---- generation-aware tiling ---------------------------------------------
    vmem_cap = _vmem_capacity_bytes()
    io_bytes = np.dtype(io_dtype).itemsize
    # ~12 live f32 working copies of the block + double-buffered in/out blocks.
    per_image_bytes = C * P * (12 * 4 + 4 * io_bytes)
    budget = max(vmem_cap // 3, 8 * 1024 * 1024)
    TN = _pick_tn(N, per_image_bytes, budget)
    grid = (-(-N // TN),)

    weight_args = (dw0, pw0_w, pw0_b, dw2, pw2_w, pw2_b,
                   w1, b1, wh, bh, ww, bw,
                   masks, poolh, poolw, exph, expw)
    weight_bytes = sum(int(a.size) * a.dtype.itemsize for a in weight_args)

    in_specs = [pl.BlockSpec((TN, C, P), lambda n: (n, 0, 0))]
    in_specs += [_const_spec(a) for a in weight_args]
    out_specs = pl.BlockSpec((TN, C, P), lambda n: (n, 0, 0))

    # Always set the scoped-VMEM limit explicitly (v5e default is only 16 MiB);
    # keep headroom below the physical capacity (64 MiB on v7x).
    est_need = TN * per_image_bytes + weight_bytes + (2 << 20)
    vmem_limit = int(max(min(vmem_cap * 3 // 4,
                             max(2 * est_need, 32 * 1024 * 1024)),
                         est_need))

    flops = (2 * 17 * N * C * P                       # depthwise 3x3 convs
             + 2 * 2 * N * C * C * P                  # 1x1 convs
             + 2 * 2 * N * C * P * (H + Wd)           # pool + expand matmuls
             + 4 * 2 * N * C * mip * (H + Wd))        # CoordAtt 1x1 convs
    cost = pl.CostEstimate(flops=int(flops),
                           transcendentals=int(N * (C + mip) * (H + Wd)),
                           bytes_accessed=int(2 * N * C * P * io_bytes
                                              + weight_bytes))

    kernel = functools.partial(space_fused_kernel, W=Wd)
    out3 = pl.pallas_call(
        kernel,
        out_shape=jax.ShapeDtypeStruct((N, C, P), io_dtype),
        grid=grid,
        in_specs=in_specs,
        out_specs=out_specs,
        compiler_params=pltpu.CompilerParams(
            dimension_semantics=("parallel",),
            vmem_limit_bytes=vmem_limit),
        cost_estimate=cost,
    )(x3, *weight_args)

    return out3.reshape(N, C, H, Wd)                  # free reshape back to NCHW


# --------------------------------------------------------------------------- #
# Pure-JAX reference (mirrors the PyTorch module in eval mode)
# --------------------------------------------------------------------------- #
def space_forward_reference(x, params):
    def conv_block(x, dw, pw_w, pw_b, bn):
        C = x.shape[1]
        x = lax.conv_general_dilated(
            x, dw, window_strides=(1, 1), padding=((1, 1), (1, 1)),
            dimension_numbers=("NCHW", "OIHW", "NCHW"), feature_group_count=C)
        x = jnp.einsum("oc,nchw->nohw", pw_w, x) + pw_b[None, :, None, None]
        scale = bn["gamma"] / jnp.sqrt(bn["var"] + bn["eps"])
        shift = bn["beta"] - bn["mean"] * scale
        x = x * scale[None, :, None, None] + shift[None, :, None, None]
        return jnp.maximum(x, 0.0)

    x1 = conv_block(x, params["dw0"], params["pw0_w"], params["pw0_b"], params["bn0"])
    x1 = conv_block(x1, params["dw2"], params["pw2_w"], params["pw2_b"], params["bn2"])

    H = x.shape[2]
    xh = jnp.mean(x1, axis=3)                                   # (N, C, H)
    xw = jnp.mean(x1, axis=2)                                   # (N, C, W)
    y = jnp.concatenate([xh, xw], axis=2)                       # (N, C, H+W)
    y = jnp.einsum("mc,nct->nmt", params["ca_w1"], y) + params["ca_b1"][None, :, None]
    bn1 = params["bn1"]
    scale = bn1["gamma"] / jnp.sqrt(bn1["var"] + bn1["eps"])
    shift = bn1["beta"] - bn1["mean"] * scale
    y = y * scale[None, :, None] + shift[None, :, None]
    y = y * (jnp.clip(y + 3.0, 0.0, 6.0) / 6.0)
    yh, yw = y[:, :, :H], y[:, :, H:]
    ah = jax.nn.sigmoid(jnp.einsum("cm,nmt->nct", params["ca_wh"], yh)
                        + params["ca_bh"][None, :, None])       # (N, C, H)
    aw = jax.nn.sigmoid(jnp.einsum("cm,nmt->nct", params["ca_ww"], yw)
                        + params["ca_bw"][None, :, None])       # (N, C, W)
    return x1 * aw[:, :, None, :] * ah[:, :, :, None]


# --------------------------------------------------------------------------- #
# Deterministic parameters
# --------------------------------------------------------------------------- #
def make_params(key, dim, reduction=32, eps=1e-5):
    # TODO(synk): BatchNorm is implemented in eval mode (folded running stats);
    # training-mode batch statistics are not computed in-kernel.
    mip = max(8, dim // reduction)
    ks = iter(jax.random.split(key, 24))

    def nrm(shape, s):
        return s * jax.random.normal(next(ks), shape, jnp.float32)

    def bn(c):
        return {"gamma": 1.0 + 0.1 * jax.random.normal(next(ks), (c,), jnp.float32),
                "beta": 0.1 * jax.random.normal(next(ks), (c,), jnp.float32),
                "mean": 0.1 * jax.random.normal(next(ks), (c,), jnp.float32),
                "var": jnp.abs(jax.random.normal(next(ks), (c,), jnp.float32)) + 0.5,
                "eps": eps}

    return {
        "dw0": nrm((dim, 1, 3, 3), 0.25), "pw0_w": nrm((dim, dim), 0.3),
        "pw0_b": nrm((dim,), 0.1), "bn0": bn(dim),
        "dw2": nrm((dim, 1, 3, 3), 0.25), "pw2_w": nrm((dim, dim), 0.3),
        "pw2_b": nrm((dim,), 0.1), "bn2": bn(dim),
        "ca_w1": nrm((mip, dim), 0.3), "ca_b1": nrm((mip,), 0.1), "bn1": bn(mip),
        "ca_wh": nrm((dim, mip), 0.3), "ca_bh": nrm((dim,), 0.1),
        "ca_ww": nrm((dim, mip), 0.3), "ca_bw": nrm((dim,), 0.1),
    }


if __name__ == "__main__":
    key = jax.random.PRNGKey(0)
    k_x, k_p = jax.random.split(key)

    N, C, H, W = 2, 4, 16, 16            # NCHW, matching the PyTorch module
    x = jax.random.normal(k_x, (N, C, H, W), jnp.float32)
    params = make_params(k_p, dim=C)

    out = jax.block_until_ready(space_forward_pallas(x, params))
    ref = jax.block_until_ready(space_forward_reference(x, params))
    assert out.shape == (N, C, H, W) and out.dtype == x.dtype
    np.testing.assert_allclose(np.asarray(out), np.asarray(ref),
                               atol=5e-3, rtol=5e-3)

    # bf16 I/O path: validated against the f32 reference evaluated on the
    # bf16-quantized input (loose tolerance for bf16 MXU operands/weights).
    x_bf16 = x.astype(jnp.bfloat16)
    out_bf16 = jax.block_until_ready(space_forward_pallas(x_bf16, params))
    assert out_bf16.dtype == jnp.bfloat16
    ref_bf16 = space_forward_reference(x_bf16.astype(jnp.float32), params)
    np.testing.assert_allclose(np.asarray(out_bf16.astype(jnp.float32)),
                               np.asarray(ref_bf16), atol=6e-2, rtol=6e-2)

    print("KERNEL_OK")
</pallas_src>

<mosaic_0001>
module attributes {stable_mosaic.version = 11 : i64} {
  func.func @space_fused_kernel(%arg0: i32, %arg1: memref<1x4x256xf32, #tpu.memory_space<vmem>>, %arg2: memref<9x4x1xf32, #tpu.memory_space<vmem>>, %arg3: memref<4x4xf32, #tpu.memory_space<vmem>>, %arg4: memref<4x1xf32, #tpu.memory_space<vmem>>, %arg5: memref<9x4x1xf32, #tpu.memory_space<vmem>>, %arg6: memref<4x4xf32, #tpu.memory_space<vmem>>, %arg7: memref<4x1xf32, #tpu.memory_space<vmem>>, %arg8: memref<8x4xf32, #tpu.memory_space<vmem>>, %arg9: memref<8x1xf32, #tpu.memory_space<vmem>>, %arg10: memref<4x8xf32, #tpu.memory_space<vmem>>, %arg11: memref<4x1xf32, #tpu.memory_space<vmem>>, %arg12: memref<4x8xf32, #tpu.memory_space<vmem>>, %arg13: memref<4x1xf32, #tpu.memory_space<vmem>>, %arg14: memref<4x1x256xf32, #tpu.memory_space<vmem>>, %arg15: memref<256x16xf32, #tpu.memory_space<vmem>>, %arg16: memref<256x16xf32, #tpu.memory_space<vmem>>, %arg17: memref<16x256xf32, #tpu.memory_space<vmem>>, %arg18: memref<16x256xf32, #tpu.memory_space<vmem>>, %arg19: memref<1x4x256xf32, #tpu.memory_space<vmem>>) attributes {dimension_semantics = [#tpu.dimension_semantics<parallel>], iteration_bounds = array<i64: 2>, scalar_prefetch = 0 : i64, scratch_operands = 0 : i64, tpu.core_type = #tpu.core_type<tc>, window_params = [{transform_indices = @transform_0, window_bounds = array<i64: 1, 4, 256>}, {pipeline_mode = #tpu.pipeline_mode<synchronous>, transform_indices = @transform_1, window_bounds = array<i64: 9, 4, 1>}, {pipeline_mode = #tpu.pipeline_mode<synchronous>, transform_indices = @transform_2, window_bounds = array<i64: 4, 4>}, {pipeline_mode = #tpu.pipeline_mode<synchronous>, transform_indices = @transform_3, window_bounds = array<i64: 4, 1>}, {pipeline_mode = #tpu.pipeline_mode<synchronous>, transform_indices = @transform_4, window_bounds = array<i64: 9, 4, 1>}, {pipeline_mode = #tpu.pipeline_mode<synchronous>, transform_indices = @transform_5, window_bounds = array<i64: 4, 4>}, {pipeline_mode = #tpu.pipeline_mode<synchronous>, transform_indices = @transform_6, window_bounds = array<i64: 4, 1>}, {pipeline_mode = #tpu.pipeline_mode<synchronous>, transform_indices = @transform_7, window_bounds = array<i64: 8, 4>}, {pipeline_mode = #tpu.pipeline_mode<synchronous>, transform_indices = @transform_8, window_bounds = array<i64: 8, 1>}, {pipeline_mode = #tpu.pipeline_mode<synchronous>, transform_indices = @transform_9, window_bounds = array<i64: 4, 8>}, {pipeline_mode = #tpu.pipeline_mode<synchronous>, transform_indices = @transform_10, window_bounds = array<i64: 4, 1>}, {pipeline_mode = #tpu.pipeline_mode<synchronous>, transform_indices = @transform_11, window_bounds = array<i64: 4, 8>}, {pipeline_mode = #tpu.pipeline_mode<synchronous>, transform_indices = @transform_12, window_bounds = array<i64: 4, 1>}, {pipeline_mode = #tpu.pipeline_mode<synchronous>, transform_indices = @transform_13, window_bounds = array<i64: 4, 1, 256>}, {pipeline_mode = #tpu.pipeline_mode<synchronous>, transform_indices = @transform_14, window_bounds = array<i64: 256, 16>}, {pipeline_mode = #tpu.pipeline_mode<synchronous>, transform_indices = @transform_15, window_bounds = array<i64: 256, 16>}, {pipeline_mode = #tpu.pipeline_mode<synchronous>, transform_indices = @transform_16, window_bounds = array<i64: 16, 256>}, {pipeline_mode = #tpu.pipeline_mode<synchronous>, transform_indices = @transform_17, window_bounds = array<i64: 16, 256>}, {transform_indices = @transform_18, window_bounds = array<i64: 1, 4, 256>}]} {
    %c0 = arith.constant 0 : index
    %c0_0 = arith.constant 0 : index
    %c0_1 = arith.constant 0 : index
    %0 = vector.load %arg1[%c0, %c0_0, %c0_1] : memref<1x4x256xf32, #tpu.memory_space<vmem>>, vector<1x4x256xf32>
    %c0_2 = arith.constant 0 : index
    %c0_3 = arith.constant 0 : index
    %c0_4 = arith.constant 0 : index
    %1 = vector.load %arg14[%c0_2, %c0_3, %c0_4] : memref<4x1x256xf32, #tpu.memory_space<vmem>>, vector<4x1x256xf32>
    %2 = vector.extract_strided_slice %1 {offsets = [0, 0, 0], sizes = [1, 1, 256], strides = [1, 1, 1]} : vector<4x1x256xf32> to vector<1x1x256xf32>
    %3 = vector.shape_cast %2 : vector<1x1x256xf32> to vector<1x256xf32>
    %4 = vector.extract_strided_slice %1 {offsets = [1, 0, 0], sizes = [1, 1, 256], strides = [1, 1, 1]} : vector<4x1x256xf32> to vector<1x1x256xf32>
    %5 = vector.shape_cast %4 : vector<1x1x256xf32> to vector<1x256xf32>
    %6 = vector.extract_strided_slice %1 {offsets = [2, 0, 0], sizes = [1, 1, 256], strides = [1, 1, 1]} : vector<4x1x256xf32> to vector<1x1x256xf32>
    %7 = vector.shape_cast %6 : vector<1x1x256xf32> to vector<1x256xf32>
    %8 = vector.extract_strided_slice %1 {offsets = [3, 0, 0], sizes = [1, 1, 256], strides = [1, 1, 1]} : vector<4x1x256xf32> to vector<1x1x256xf32>
    %9 = vector.shape_cast %8 : vector<1x1x256xf32> to vector<1x256xf32>
    %c0_5 = arith.constant 0 : index
    %c0_6 = arith.constant 0 : index
    %c0_7 = arith.constant 0 : index
    %10 = vector.load %arg2[%c0_5, %c0_6, %c0_7] : memref<9x4x1xf32, #tpu.memory_space<vmem>>, vector<9x4x1xf32>
    %c1_i32 = arith.constant 1 : i32
    %11 = tpu.dynamic_rotate %0 by %c1_i32 dim 2 : vector<1x4x256xf32>, i32 -> vector<1x4x256xf32>
    %12 = vector.shape_cast %3 : vector<1x256xf32> to vector<1x1x256xf32>
    %13 = vector.broadcast %12 : vector<1x1x256xf32> to vector<1x4x256xf32>
    %14 = arith.mulf %11, %13 : vector<1x4x256xf32>
    %c255_i32 = arith.constant 255 : i32
    %15 = tpu.dynamic_rotate %0 by %c255_i32 dim 2 : vector<1x4x256xf32>, i32 -> vector<1x4x256xf32>
    %16 = vector.shape_cast %5 : vector<1x256xf32> to vector<1x1x256xf32>
    %17 = vector.broadcast %16 : vector<1x1x256xf32> to vector<1x4x256xf32>
    %18 = arith.mulf %15, %17 : vector<1x4x256xf32>
    %19 = vector.extract_strided_slice %10 {offsets = [3, 0, 0], sizes = [1, 4, 1], strides = [1, 1, 1]} : vector<9x4x1xf32> to vector<1x4x1xf32>
    %20 = vector.shape_cast %19 : vector<1x4x1xf32> to vector<4x1xf32>
    %21 = vector.shape_cast %20 : vector<4x1xf32> to vector<1x4x1xf32>
    %22 = vector.broadcast %21 : vector<1x4x1xf32> to vector<1x4x256xf32>
    %23 = arith.mulf %22, %14 : vector<1x4x256xf32>
    %24 = vector.extract_strided_slice %10 {offsets = [4, 0, 0], sizes = [1, 4, 1], strides = [1, 1, 1]} : vector<9x4x1xf32> to vector<1x4x1xf32>
    %25 = vector.shape_cast %24 : vector<1x4x1xf32> to vector<4x1xf32>
    %26 = vector.shape_cast %25 : vector<4x1xf32> to vector<1x4x1xf32>
    %27 = vector.broadcast %26 : vector<1x4x1xf32> to vector<1x4x256xf32>
    %28 = arith.mulf %27, %0 : vector<1x4x256xf32>
    %29 = arith.addf %23, %28 : vector<1x4x256xf32>
    %30 = vector.extract_strided_slice %10 {offsets = [5, 0, 0], sizes = [1, 4, 1], strides = [1, 1, 1]} : vector<9x4x1xf32> to vector<1x4x1xf32>
    %31 = vector.shape_cast %30 : vector<1x4x1xf32> to vector<4x1xf32>
    %32 = vector.shape_cast %31 : vector<4x1xf32> to vector<1x4x1xf32>
    %33 = vector.broadcast %32 : vector<1x4x1xf32> to vector<1x4x256xf32>
    %34 = arith.mulf %33, %18 : vector<1x4x256xf32>
    %35 = arith.addf %29, %34 : vector<1x4x256xf32>
    %c16_i32 = arith.constant 16 : i32
    %36 = tpu.dynamic_rotate %14 by %c16_i32 dim 2 : vector<1x4x256xf32>, i32 -> vector<1x4x256xf32>
    %c16_i32_8 = arith.constant 16 : i32
    %37 = tpu.dynamic_rotate %0 by %c16_i32_8 dim 2 : vector<1x4x256xf32>, i32 -> vector<1x4x256xf32>
    %c16_i32_9 = arith.constant 16 : i32
    %38 = tpu.dynamic_rotate %18 by %c16_i32_9 dim 2 : vector<1x4x256xf32>, i32 -> vector<1x4x256xf32>
    %39 = vector.extract_strided_slice %10 {offsets = [0, 0, 0], sizes = [1, 4, 1], strides = [1, 1, 1]} : vector<9x4x1xf32> to vector<1x4x1xf32>
    %40 = vector.shape_cast %39 : vector<1x4x1xf32> to vector<4x1xf32>
    %41 = vector.shape_cast %40 : vector<4x1xf32> to vector<1x4x1xf32>
    %42 = vector.broadcast %41 : vector<1x4x1xf32> to vector<1x4x256xf32>
    %43 = arith.mulf %42, %36 : vector<1x4x256xf32>
    %44 = vector.extract_strided_slice %10 {offsets = [1, 0, 0], sizes = [1, 4, 1], strides = [1, 1, 1]} : vector<9x4x1xf32> to vector<1x4x1xf32>
    %45 = vector.shape_cast %44 : vector<1x4x1xf32> to vector<4x1xf32>
    %46 = vector.shape_cast %45 : vector<4x1xf32> to vector<1x4x1xf32>
    %47 = vector.broadcast %46 : vector<1x4x1xf32> to vector<1x4x256xf32>
    %48 = arith.mulf %47, %37 : vector<1x4x256xf32>
    %49 = arith.addf %43, %48 : vector<1x4x256xf32>
    %50 = vector.extract_strided_slice %10 {offsets = [2, 0, 0], sizes = [1, 4, 1], strides = [1, 1, 1]} : vector<9x4x1xf32> to vector<1x4x1xf32>
    %51 = vector.shape_cast %50 : vector<1x4x1xf32> to vector<4x1xf32>
    %52 = vector.shape_cast %51 : vector<4x1xf32> to vector<1x4x1xf32>
    %53 = vector.broadcast %52 : vector<1x4x1xf32> to vector<1x4x256xf32>
    %54 = arith.mulf %53, %38 : vector<1x4x256xf32>
    %55 = arith.addf %49, %54 : vector<1x4x256xf32>
    %56 = vector.shape_cast %7 : vector<1x256xf32> to vector<1x1x256xf32>
    %57 = vector.broadcast %56 : vector<1x1x256xf32> to vector<1x4x256xf32>
    %58 = arith.mulf %57, %55 : vector<1x4x256xf32>
    %59 = arith.addf %35, %58 : vector<1x4x256xf32>
    %c240_i32 = arith.constant 240 : i32
    %60 = tpu.dynamic_rotate %14 by %c240_i32 dim 2 : vector<1x4x256xf32>, i32 -> vector<1x4x256xf32>
    %c240_i32_10 = arith.constant 240 : i32
    %61 = tpu.dynamic_rotate %0 by %c240_i32_10 dim 2 : vector<1x4x256xf32>, i32 -> vector<1x4x256xf32>
    %c240_i32_11 = arith.constant 240 : i32
    %62 = tpu.dynamic_rotate %18 by %c240_i32_11 dim 2 : vector<1x4x256xf32>, i32 -> vector<1x4x256xf32>
    %63 = vector.extract_strided_slice %10 {offsets = [6, 0, 0], sizes = [1, 4, 1], strides = [1, 1, 1]} : vector<9x4x1xf32> to vector<1x4x1xf32>
    %64 = vector.shape_cast %63 : vector<1x4x1xf32> to vector<4x1xf32>
    %65 = vector.shape_cast %64 : vector<4x1xf32> to vector<1x4x1xf32>
    %66 = vector.broadcast %65 : vector<1x4x1xf32> to vector<1x4x256xf32>
    %67 = arith.mulf %66, %60 : vector<1x4x256xf32>
    %68 = vector.extract_strided_slice %10 {offsets = [7, 0, 0], sizes = [1, 4, 1], strides = [1, 1, 1]} : vector<9x4x1xf32> to vector<1x4x1xf32>
    %69 = vector.shape_cast %68 : vector<1x4x1xf32> to vector<4x1xf32>
    %70 = vector.shape_cast %69 : vector<4x1xf32> to vector<1x4x1xf32>
    %71 = vector.broadcast %70 : vector<1x4x1xf32> to vector<1x4x256xf32>
    %72 = arith.mulf %71, %61 : vector<1x4x256xf32>
    %73 = arith.addf %67, %72 : vector<1x4x256xf32>
    %74 = vector.extract_strided_slice %10 {offsets = [8, 0, 0], sizes = [1, 4, 1], strides = [1, 1, 1]} : vector<9x4x1xf32> to vector<1x4x1xf32>
    %75 = vector.shape_cast %74 : vector<1x4x1xf32> to vector<4x1xf32>
    %76 = vector.shape_cast %75 : vector<4x1xf32> to vector<1x4x1xf32>
    %77 = vector.broadcast %76 : vector<1x4x1xf32> to vector<1x4x256xf32>
    %78 = arith.mulf %77, %62 : vector<1x4x256xf32>
    %79 = arith.addf %73, %78 : vector<1x4x256xf32>
    %80 = vector.shape_cast %9 : vector<1x256xf32> to vector<1x1x256xf32>
    %81 = vector.broadcast %80 : vector<1x1x256xf32> to vector<1x4x256xf32>
    %82 = arith.mulf %81, %79 : vector<1x4x256xf32>
    %83 = arith.addf %59, %82 : vector<1x4x256xf32>
    %c0_12 = arith.constant 0 : index
    %c0_13 = arith.constant 0 : index
    %84 = vector.load %arg3[%c0_12, %c0_13] : memref<4x4xf32, #tpu.memory_space<vmem>>, vector<4x4xf32>
    %85 = vector.shape_cast %84 : vector<4x4xf32> to vector<1x4x4xf32>
    %cst = arith.constant dense<0.000000e+00> : vector<1x4x256xf32>
    %86 = tpu.matmul %85, %83, %cst {dimension_numbers = #tpu.dot_dimension_numbers<[2], [1], [1], [2], [0, 0, 0, 1, 1, 2], [0], [0]>} : vector<1x4x4xf32>, vector<1x4x256xf32>, vector<1x4x256xf32> -> vector<1x4x256xf32>
    %c0_14 = arith.constant 0 : index
    %c0_15 = arith.constant 0 : index
    %87 = vector.load %arg4[%c0_14, %c0_15] : memref<4x1xf32, #tpu.memory_space<vmem>>, vector<4x1xf32>
    %88 = vector.shape_cast %87 : vector<4x1xf32> to vector<1x4x1xf32>
    %89 = vector.broadcast %88 : vector<1x4x1xf32> to vector<1x4x256xf32>
    %90 = arith.addf %86, %89 : vector<1x4x256xf32>
    %cst_16 = arith.constant 0.000000e+00 : f32
    %91 = vector.broadcast %cst_16 : f32 to vector<1x4x256xf32>
    %92 = arith.maximumf %90, %91 : vector<1x4x256xf32>
    %c0_17 = arith.constant 0 : index
    %c0_18 = arith.constant 0 : index
    %c0_19 = arith.constant 0 : index
    %93 = vector.load %arg5[%c0_17, %c0_18, %c0_19] : memref<9x4x1xf32, #tpu.memory_space<vmem>>, vector<9x4x1xf32>
    %c1_i32_20 = arith.constant 1 : i32
    %94 = tpu.dynamic_rotate %92 by %c1_i32_20 dim 2 : vector<1x4x256xf32>, i32 -> vector<1x4x256xf32>
    %95 = vector.shape_cast %3 : vector<1x256xf32> to vector<1x1x256xf32>
    %96 = vector.broadcast %95 : vector<1x1x256xf32> to vector<1x4x256xf32>
    %97 = arith.mulf %94, %96 : vector<1x4x256xf32>
    %c255_i32_21 = arith.constant 255 : i32
    %98 = tpu.dynamic_rotate %92 by %c255_i32_21 dim 2 : vector<1x4x256xf32>, i32 -> vector<1x4x256xf32>
    %99 = vector.shape_cast %5 : vector<1x256xf32> to vector<1x1x256xf32>
    %100 = vector.broadcast %99 : vector<1x1x256xf32> to vector<1x4x256xf32>
    %101 = arith.mulf %98, %100 : vector<1x4x256xf32>
    %102 = vector.extract_strided_slice %93 {offsets = [3, 0, 0], sizes = [1, 4, 1], strides = [1, 1, 1]} : vector<9x4x1xf32> to vector<1x4x1xf32>
    %103 = vector.shape_cast %102 : vector<1x4x1xf32> to vector<4x1xf32>
    %104 = vector.shape_cast %103 : vector<4x1xf32> to vector<1x4x1xf32>
    %105 = vector.broadcast %104 : vector<1x4x1xf32> to vector<1x4x256xf32>
    %106 = arith.mulf %105, %97 : vector<1x4x256xf32>
    %107 = vector.extract_strided_slice %93 {offsets = [4, 0, 0], sizes = [1, 4, 1], strides = [1, 1, 1]} : vector<9x4x1xf32> to vector<1x4x1xf32>
    %108 = vector.shape_cast %107 : vector<1x4x1xf32> to vector<4x1xf32>
    %109 = vector.shape_cast %108 : vector<4x1xf32> to vector<1x4x1xf32>
    %110 = vector.broadcast %109 : vector<1x4x1xf32> to vector<1x4x256xf32>
    %111 = arith.mulf %110, %92 : vector<1x4x256xf32>
    %112 = arith.addf %106, %111 : vector<1x4x256xf32>
    %113 = vector.extract_strided_slice %93 {offsets = [5, 0, 0], sizes = [1, 4, 1], strides = [1, 1, 1]} : vector<9x4x1xf32> to vector<1x4x1xf32>
    %114 = vector.shape_cast %113 : vector<1x4x1xf32> to vector<4x1xf32>
    %115 = vector.shape_cast %114 : vector<4x1xf32> to vector<1x4x1xf32>
    %116 = vector.broadcast %115 : vector<1x4x1xf32> to vector<1x4x256xf32>
    %117 = arith.mulf %116, %101 : vector<1x4x256xf32>
    %118 = arith.addf %112, %117 : vector<1x4x256xf32>
    %c16_i32_22 = arith.constant 16 : i32
    %119 = tpu.dynamic_rotate %97 by %c16_i32_22 dim 2 : vector<1x4x256xf32>, i32 -> vector<1x4x256xf32>
    %c16_i32_23 = arith.constant 16 : i32
    %120 = tpu.dynamic_rotate %92 by %c16_i32_23 dim 2 : vector<1x4x256xf32>, i32 -> vector<1x4x256xf32>
    %c16_i32_24 = arith.constant 16 : i32
    %121 = tpu.dynamic_rotate %101 by %c16_i32_24 dim 2 : vector<1x4x256xf32>, i32 -> vector<1x4x256xf32>
    %122 = vector.extract_strided_slice %93 {offsets = [0, 0, 0], sizes = [1, 4, 1], strides = [1, 1, 1]} : vector<9x4x1xf32> to vector<1x4x1xf32>
    %123 = vector.shape_cast %122 : vector<1x4x1xf32> to vector<4x1xf32>
    %124 = vector.shape_cast %123 : vector<4x1xf32> to vector<1x4x1xf32>
    %125 = vector.broadcast %124 : vector<1x4x1xf32> to vector<1x4x256xf32>
    %126 = arith.mulf %125, %119 : vector<1x4x256xf32>
    %127 = vector.extract_strided_slice %93 {offsets = [1, 0, 0], sizes = [1, 4, 1], strides = [1, 1, 1]} : vector<9x4x1xf32> to vector<1x4x1xf32>
    %128 = vector.shape_cast %127 : vector<1x4x1xf32> to vector<4x1xf32>
    %129 = vector.shape_cast %128 : vector<4x1xf32> to vector<1x4x1xf32>
    %130 = vector.broadcast %129 : vector<1x4x1xf32> to vector<1x4x256xf32>
    %131 = arith.mulf %130, %120 : vector<1x4x256xf32>
    %132 = arith.addf %126, %131 : vector<1x4x256xf32>
    %133 = vector.extract_strided_slice %93 {offsets = [2, 0, 0], sizes = [1, 4, 1], strides = [1, 1, 1]} : vector<9x4x1xf32> to vector<1x4x1xf32>
    %134 = vector.shape_cast %133 : vector<1x4x1xf32> to vector<4x1xf32>
    %135 = vector.shape_cast %134 : vector<4x1xf32> to vector<1x4x1xf32>
    %136 = vector.broadcast %135 : vector<1x4x1xf32> to vector<1x4x256xf32>
    %137 = arith.mulf %136, %121 : vector<1x4x256xf32>
    %138 = arith.addf %132, %137 : vector<1x4x256xf32>
    %139 = vector.shape_cast %7 : vector<1x256xf32> to vector<1x1x256xf32>
    %140 = vector.broadcast %139 : vector<1x1x256xf32> to vector<1x4x256xf32>
    %141 = arith.mulf %140, %138 : vector<1x4x256xf32>
    %142 = arith.addf %118, %141 : vector<1x4x256xf32>
    %c240_i32_25 = arith.constant 240 : i32
    %143 = tpu.dynamic_rotate %97 by %c240_i32_25 dim 2 : vector<1x4x256xf32>, i32 -> vector<1x4x256xf32>
    %c240_i32_26 = arith.constant 240 : i32
    %144 = tpu.dynamic_rotate %92 by %c240_i32_26 dim 2 : vector<1x4x256xf32>, i32 -> vector<1x4x256xf32>
    %c240_i32_27 = arith.constant 240 : i32
    %145 = tpu.dynamic_rotate %101 by %c240_i32_27 dim 2 : vector<1x4x256xf32>, i32 -> vector<1x4x256xf32>
    %146 = vector.extract_strided_slice %93 {offsets = [6, 0, 0], sizes = [1, 4, 1], strides = [1, 1, 1]} : vector<9x4x1xf32> to vector<1x4x1xf32>
    %147 = vector.shape_cast %146 : vector<1x4x1xf32> to vector<4x1xf32>
    %148 = vector.shape_cast %147 : vector<4x1xf32> to vector<1x4x1xf32>
    %149 = vector.broadcast %148 : vector<1x4x1xf32> to vector<1x4x256xf32>
    %150 = arith.mulf %149, %143 : vector<1x4x256xf32>
    %151 = vector.extract_strided_slice %93 {offsets = [7, 0, 0], sizes = [1, 4, 1], strides = [1, 1, 1]} : vector<9x4x1xf32> to vector<1x4x1xf32>
    %152 = vector.shape_cast %151 : vector<1x4x1xf32> to vector<4x1xf32>
    %153 = vector.shape_cast %152 : vector<4x1xf32> to vector<1x4x1xf32>
    %154 = vector.broadcast %153 : vector<1x4x1xf32> to vector<1x4x256xf32>
    %155 = arith.mulf %154, %144 : vector<1x4x256xf32>
    %156 = arith.addf %150, %155 : vector<1x4x256xf32>
    %157 = vector.extract_strided_slice %93 {offsets = [8, 0, 0], sizes = [1, 4, 1], strides = [1, 1, 1]} : vector<9x4x1xf32> to vector<1x4x1xf32>
    %158 = vector.shape_cast %157 : vector<1x4x1xf32> to vector<4x1xf32>
    %159 = vector.shape_cast %158 : vector<4x1xf32> to vector<1x4x1xf32>
    %160 = vector.broadcast %159 : vector<1x4x1xf32> to vector<1x4x256xf32>
    %161 = arith.mulf %160, %145 : vector<1x4x256xf32>
    %162 = arith.addf %156, %161 : vector<1x4x256xf32>
    %163 = vector.shape_cast %9 : vector<1x256xf32> to vector<1x1x256xf32>
    %164 = vector.broadcast %163 : vector<1x1x256xf32> to vector<1x4x256xf32>
    %165 = arith.mulf %164, %162 : vector<1x4x256xf32>
    %166 = arith.addf %142, %165 : vector<1x4x256xf32>
    %c0_28 = arith.constant 0 : index
    %c0_29 = arith.constant 0 : index
    %167 = vector.load %arg6[%c0_28, %c0_29] : memref<4x4xf32, #tpu.memory_space<vmem>>, vector<4x4xf32>
    %168 = vector.shape_cast %167 : vector<4x4xf32> to vector<1x4x4xf32>
    %cst_30 = arith.constant dense<0.000000e+00> : vector<1x4x256xf32>
    %169 = tpu.matmul %168, %166, %cst_30 {dimension_numbers = #tpu.dot_dimension_numbers<[2], [1], [1], [2], [0, 0, 0, 1, 1, 2], [0], [0]>} : vector<1x4x4xf32>, vector<1x4x256xf32>, vector<1x4x256xf32> -> vector<1x4x256xf32>
    %c0_31 = arith.constant 0 : index
    %c0_32 = arith.constant 0 : index
    %170 = vector.load %arg7[%c0_31, %c0_32] : memref<4x1xf32, #tpu.memory_space<vmem>>, vector<4x1xf32>
    %171 = vector.shape_cast %170 : vector<4x1xf32> to vector<1x4x1xf32>
    %172 = vector.broadcast %171 : vector<1x4x1xf32> to vector<1x4x256xf32>
    %173 = arith.addf %169, %172 : vector<1x4x256xf32>
    %cst_33 = arith.constant 0.000000e+00 : f32
    %174 = vector.broadcast %cst_33 : f32 to vector<1x4x256xf32>
    %175 = arith.maximumf %173, %174 : vector<1x4x256xf32>
    %c0_34 = arith.constant 0 : index
    %c0_35 = arith.constant 0 : index
    %176 = vector.load %arg15[%c0_34, %c0_35] : memref<256x16xf32, #tpu.memory_space<vmem>>, vector<256x16xf32>
    %cst_36 = arith.constant dense<0.000000e+00> : vector<1x4x16xf32>
    %177 = tpu.matmul %175, %176, %cst_36 {dimension_numbers = #tpu.dot_dimension_numbers<[2], [0], [0, 1], [1], [0, 0, 0, 1, 1, 1], [], []>} : vector<1x4x256xf32>, vector<256x16xf32>, vector<1x4x16xf32> -> vector<1x4x16xf32>
    %c0_37 = arith.constant 0 : index
    %c0_38 = arith.constant 0 : index
    %178 = vector.load %arg16[%c0_37, %c0_38] : memref<256x16xf32, #tpu.memory_space<vmem>>, vector<256x16xf32>
    %cst_39 = arith.constant dense<0.000000e+00> : vector<1x4x16xf32>
    %179 = tpu.matmul %175, %178, %cst_39 {dimension_numbers = #tpu.dot_dimension_numbers<[2], [0], [0, 1], [1], [0, 0, 0, 1, 1, 1], [], []>} : vector<1x4x256xf32>, vector<256x16xf32>, vector<1x4x16xf32> -> vector<1x4x16xf32>
    %c0_40 = arith.constant 0 : index
    %c0_41 = arith.constant 0 : index
    %180 = vector.load %arg8[%c0_40, %c0_41] : memref<8x4xf32, #tpu.memory_space<vmem>>, vector<8x4xf32>
    %181 = vector.shape_cast %180 : vector<8x4xf32> to vector<1x8x4xf32>
    %cst_42 = arith.constant dense<0.000000e+00> : vector<1x8x16xf32>
    %182 = tpu.matmul %181, %177, %cst_42 {dimension_numbers = #tpu.dot_dimension_numbers<[2], [1], [1], [2], [0, 0, 0, 1, 1, 2], [0], [0]>} : vector<1x8x4xf32>, vector<1x4x16xf32>, vector<1x8x16xf32> -> vector<1x8x16xf32>
    %c0_43 = arith.constant 0 : index
    %c0_44 = arith.constant 0 : index
    %183 = vector.load %arg9[%c0_43, %c0_44] : memref<8x1xf32, #tpu.memory_space<vmem>>, vector<8x1xf32>
    %184 = vector.shape_cast %183 : vector<8x1xf32> to vector<1x8x1xf32>
    %185 = vector.broadcast %184 : vector<1x8x1xf32> to vector<1x8x16xf32>
    %186 = arith.addf %182, %185 : vector<1x8x16xf32>
    %cst_45 = arith.constant 3.000000e+00 : f32
    %187 = vector.broadcast %cst_45 : f32 to vector<1x8x16xf32>
    %188 = arith.addf %186, %187 : vector<1x8x16xf32>
    %cst_46 = arith.constant 0.000000e+00 : f32
    %cst_47 = arith.constant 6.000000e+00 : f32
    %189 = vector.broadcast %cst_46 : f32 to vector<1x8x16xf32>
    %190 = arith.maximumf %189, %188 : vector<1x8x16xf32>
    %191 = vector.broadcast %cst_47 : f32 to vector<1x8x16xf32>
    %192 = arith.minimumf %191, %190 : vector<1x8x16xf32>
    %cst_48 = arith.constant 0.166666672 : f32
    %193 = vector.broadcast %cst_48 : f32 to vector<1x8x16xf32>
    %194 = arith.mulf %192, %193 : vector<1x8x16xf32>
    %195 = arith.mulf %186, %194 : vector<1x8x16xf32>
    %c0_49 = arith.constant 0 : index
    %c0_50 = arith.constant 0 : index
    %196 = vector.load %arg8[%c0_49, %c0_50] : memref<8x4xf32, #tpu.memory_space<vmem>>, vector<8x4xf32>
    %197 = vector.shape_cast %196 : vector<8x4xf32> to vector<1x8x4xf32>
    %cst_51 = arith.constant dense<0.000000e+00> : vector<1x8x16xf32>
    %198 = tpu.matmul %197, %179, %cst_51 {dimension_numbers = #tpu.dot_dimension_numbers<[2], [1], [1], [2], [0, 0, 0, 1, 1, 2], [0], [0]>} : vector<1x8x4xf32>, vector<1x4x16xf32>, vector<1x8x16xf32> -> vector<1x8x16xf32>
    %c0_52 = arith.constant 0 : index
    %c0_53 = arith.constant 0 : index
    %199 = vector.load %arg9[%c0_52, %c0_53] : memref<8x1xf32, #tpu.memory_space<vmem>>, vector<8x1xf32>
    %200 = vector.shape_cast %199 : vector<8x1xf32> to vector<1x8x1xf32>
    %201 = vector.broadcast %200 : vector<1x8x1xf32> to vector<1x8x16xf32>
    %202 = arith.addf %198, %201 : vector<1x8x16xf32>
    %cst_54 = arith.constant 3.000000e+00 : f32
    %203 = vector.broadcast %cst_54 : f32 to vector<1x8x16xf32>
    %204 = arith.addf %202, %203 : vector<1x8x16xf32>
    %cst_55 = arith.constant 0.000000e+00 : f32
    %cst_56 = arith.constant 6.000000e+00 : f32
    %205 = vector.broadcast %cst_55 : f32 to vector<1x8x16xf32>
    %206 = arith.maximumf %205, %204 : vector<1x8x16xf32>
    %207 = vector.broadcast %cst_56 : f32 to vector<1x8x16xf32>
    %208 = arith.minimumf %207, %206 : vector<1x8x16xf32>
    %cst_57 = arith.constant 0.166666672 : f32
    %209 = vector.broadcast %cst_57 : f32 to vector<1x8x16xf32>
    %210 = arith.mulf %208, %209 : vector<1x8x16xf32>
    %211 = arith.mulf %202, %210 : vector<1x8x16xf32>
    %c0_58 = arith.constant 0 : index
    %c0_59 = arith.constant 0 : index
    %212 = vector.load %arg10[%c0_58, %c0_59] : memref<4x8xf32, #tpu.memory_space<vmem>>, vector<4x8xf32>
    %213 = vector.shape_cast %212 : vector<4x8xf32> to vector<1x4x8xf32>
    %cst_60 = arith.constant dense<0.000000e+00> : vector<1x4x16xf32>
    %214 = tpu.matmul %213, %195, %cst_60 {dimension_numbers = #tpu.dot_dimension_numbers<[2], [1], [1], [2], [0, 0, 0, 1, 1, 2], [0], [0]>} : vector<1x4x8xf32>, vector<1x8x16xf32>, vector<1x4x16xf32> -> vector<1x4x16xf32>
    %c0_61 = arith.constant 0 : index
    %c0_62 = arith.constant 0 : index
    %215 = vector.load %arg11[%c0_61, %c0_62] : memref<4x1xf32, #tpu.memory_space<vmem>>, vector<4x1xf32>
    %216 = vector.shape_cast %215 : vector<4x1xf32> to vector<1x4x1xf32>
    %217 = vector.broadcast %216 : vector<1x4x1xf32> to vector<1x4x16xf32>
    %218 = arith.addf %214, %217 : vector<1x4x16xf32>
    %219 = arith.negf %218 : vector<1x4x16xf32>
    %220 = math.exp %219 : vector<1x4x16xf32>
    %cst_63 = arith.constant 1.000000e+00 : f32
    %221 = vector.broadcast %cst_63 : f32 to vector<1x4x16xf32>
    %222 = arith.addf %221, %220 : vector<1x4x16xf32>
    %223 = arith.divf %221, %222 : vector<1x4x16xf32>
    %c0_64 = arith.constant 0 : index
    %c0_65 = arith.constant 0 : index
    %224 = vector.load %arg12[%c0_64, %c0_65] : memref<4x8xf32, #tpu.memory_space<vmem>>, vector<4x8xf32>
    %225 = vector.shape_cast %224 : vector<4x8xf32> to vector<1x4x8xf32>
    %cst_66 = arith.constant dense<0.000000e+00> : vector<1x4x16xf32>
    %226 = tpu.matmul %225, %211, %cst_66 {dimension_numbers = #tpu.dot_dimension_numbers<[2], [1], [1], [2], [0, 0, 0, 1, 1, 2], [0], [0]>} : vector<1x4x8xf32>, vector<1x8x16xf32>, vector<1x4x16xf32> -> vector<1x4x16xf32>
    %c0_67 = arith.constant 0 : index
    %c0_68 = arith.constant 0 : index
    %227 = vector.load %arg13[%c0_67, %c0_68] : memref<4x1xf32, #tpu.memory_space<vmem>>, vector<4x1xf32>
    %228 = vector.shape_cast %227 : vector<4x1xf32> to vector<1x4x1xf32>
    %229 = vector.broadcast %228 : vector<1x4x1xf32> to vector<1x4x16xf32>
    %230 = arith.addf %226, %229 : vector<1x4x16xf32>
    %231 = arith.negf %230 : vector<1x4x16xf32>
    %232 = math.exp %231 : vector<1x4x16xf32>
    %cst_69 = arith.constant 1.000000e+00 : f32
    %233 = vector.broadcast %cst_69 : f32 to vector<1x4x16xf32>
    %234 = arith.addf %233, %232 : vector<1x4x16xf32>
    %235 = arith.divf %233, %234 : vector<1x4x16xf32>
    %c0_70 = arith.constant 0 : index
    %c0_71 = arith.constant 0 : index
    %236 = vector.load %arg17[%c0_70, %c0_71] : memref<16x256xf32, #tpu.memory_space<vmem>>, vector<16x256xf32>
    %cst_72 = arith.constant dense<0.000000e+00> : vector<1x4x256xf32>
    %237 = tpu.matmul %223, %236, %cst_72 {dimension_numbers = #tpu.dot_dimension_numbers<[2], [0], [0, 1], [1], [0, 0, 0, 1, 1, 1], [], []>} : vector<1x4x16xf32>, vector<16x256xf32>, vector<1x4x256xf32> -> vector<1x4x256xf32>
    %c0_73 = arith.constant 0 : index
    %c0_74 = arith.constant 0 : index
    %238 = vector.load %arg18[%c0_73, %c0_74] : memref<16x256xf32, #tpu.memory_space<vmem>>, vector<16x256xf32>
    %cst_75 = arith.constant dense<0.000000e+00> : vector<1x4x256xf32>
    %239 = tpu.matmul %235, %238, %cst_75 {dimension_numbers = #tpu.dot_dimension_numbers<[2], [0], [0, 1], [1], [0, 0, 0, 1, 1, 1], [], []>} : vector<1x4x16xf32>, vector<16x256xf32>, vector<1x4x256xf32> -> vector<1x4x256xf32>
    %240 = arith.mulf %237, %239 : vector<1x4x256xf32>
    %241 = arith.mulf %175, %240 : vector<1x4x256xf32>
    %c0_76 = arith.constant 0 : index
    %c0_77 = arith.constant 0 : index
    %c0_78 = arith.constant 0 : index
    %242 = vector.load %arg19[%c0_76, %c0_77, %c0_78] : memref<1x4x256xf32, #tpu.memory_space<vmem>>, vector<1x4x256xf32>
    tpu.vector_store %arg19[%c0_76, %c0_77, %c0_78], %241 {strides = array<i32>} : memref<1x4x256xf32, #tpu.memory_space<vmem>>, vector<1x4x256xf32>,
    return
  }
  func.func @transform_0(%arg0: i32) -> (i32, i32, i32) {
    %c0_i32 = arith.constant 0 : i32
    %c0_i32_0 = arith.constant 0 : i32
    %c0_i32_1 = arith.constant 0 : i32
    return %arg0, %c0_i32, %c0_i32_0 : i32, i32, i32
  }
  func.func @transform_1(%arg0: i32) -> (i32, i32, i32) {
    %c0_i32 = arith.constant 0 : i32
    %c0_i32_0 = arith.constant 0 : i32
    %c0_i32_1 = arith.constant 0 : i32
    %c0_i32_2 = arith.constant 0 : i32
    return %c0_i32, %c0_i32_0, %c0_i32_1 : i32, i32, i32
  }
  func.func @transform_2(%arg0: i32) -> (i32, i32) {
    %c0_i32 = arith.constant 0 : i32
    %c0_i32_0 = arith.constant 0 : i32
    %c0_i32_1 = arith.constant 0 : i32
    return %c0_i32, %c0_i32_0 : i32, i32
  }
  func.func @transform_3(%arg0: i32) -> (i32, i32) {
    %c0_i32 = arith.constant 0 : i32
    %c0_i32_0 = arith.constant 0 : i32
    %c0_i32_1 = arith.constant 0 : i32
    return %c0_i32, %c0_i32_0 : i32, i32
  }
  func.func @transform_4(%arg0: i32) -> (i32, i32, i32) {
    %c0_i32 = arith.constant 0 : i32
    %c0_i32_0 = arith.constant 0 : i32
    %c0_i32_1 = arith.constant 0 : i32
    %c0_i32_2 = arith.constant 0 : i32
    return %c0_i32, %c0_i32_0, %c0_i32_1 : i32, i32, i32
  }
  func.func @transform_5(%arg0: i32) -> (i32, i32) {
    %c0_i32 = arith.constant 0 : i32
    %c0_i32_0 = arith.constant 0 : i32
    %c0_i32_1 = arith.constant 0 : i32
    return %c0_i32, %c0_i32_0 : i32, i32
  }
  func.func @transform_6(%arg0: i32) -> (i32, i32) {
    %c0_i32 = arith.constant 0 : i32
    %c0_i32_0 = arith.constant 0 : i32
    %c0_i32_1 = arith.constant 0 : i32
    return %c0_i32, %c0_i32_0 : i32, i32
  }
  func.func @transform_7(%arg0: i32) -> (i32, i32) {
    %c0_i32 = arith.constant 0 : i32
    %c0_i32_0 = arith.constant 0 : i32
    %c0_i32_1 = arith.constant 0 : i32
    return %c0_i32, %c0_i32_0 : i32, i32
  }
  func.func @transform_8(%arg0: i32) -> (i32, i32) {
    %c0_i32 = arith.constant 0 : i32
    %c0_i32_0 = arith.constant 0 : i32
    %c0_i32_1 = arith.constant 0 : i32
    return %c0_i32, %c0_i32_0 : i32, i32
  }
  func.func @transform_9(%arg0: i32) -> (i32, i32) {
    %c0_i32 = arith.constant 0 : i32
    %c0_i32_0 = arith.constant 0 : i32
    %c0_i32_1 = arith.constant 0 : i32
    return %c0_i32, %c0_i32_0 : i32, i32
  }
  func.func @transform_10(%arg0: i32) -> (i32, i32) {
    %c0_i32 = arith.constant 0 : i32
    %c0_i32_0 = arith.constant 0 : i32
    %c0_i32_1 = arith.constant 0 : i32
    return %c0_i32, %c0_i32_0 : i32, i32
  }
  func.func @transform_11(%arg0: i32) -> (i32, i32) {
    %c0_i32 = arith.constant 0 : i32
    %c0_i32_0 = arith.constant 0 : i32
    %c0_i32_1 = arith.constant 0 : i32
    return %c0_i32, %c0_i32_0 : i32, i32
  }
  func.func @transform_12(%arg0: i32) -> (i32, i32) {
    %c0_i32 = arith.constant 0 : i32
    %c0_i32_0 = arith.constant 0 : i32
    %c0_i32_1 = arith.constant 0 : i32
    return %c0_i32, %c0_i32_0 : i32, i32
  }
  func.func @transform_13(%arg0: i32) -> (i32, i32, i32) {
    %c0_i32 = arith.constant 0 : i32
    %c0_i32_0 = arith.constant 0 : i32
    %c0_i32_1 = arith.constant 0 : i32
    %c0_i32_2 = arith.constant 0 : i32
    return %c0_i32, %c0_i32_0, %c0_i32_1 : i32, i32, i32
  }
  func.func @transform_14(%arg0: i32) -> (i32, i32) {
    %c0_i32 = arith.constant 0 : i32
    %c0_i32_0 = arith.constant 0 : i32
    %c0_i32_1 = arith.constant 0 : i32
    return %c0_i32, %c0_i32_0 : i32, i32
  }
  func.func @transform_15(%arg0: i32) -> (i32, i32) {
    %c0_i32 = arith.constant 0 : i32
    %c0_i32_0 = arith.constant 0 : i32
    %c0_i32_1 = arith.constant 0 : i32
    return %c0_i32, %c0_i32_0 : i32, i32
  }
  func.func @transform_16(%arg0: i32) -> (i32, i32) {
    %c0_i32 = arith.constant 0 : i32
    %c0_i32_0 = arith.constant 0 : i32
    %c0_i32_1 = arith.constant 0 : i32
    return %c0_i32, %c0_i32_0 : i32, i32
  }
  func.func @transform_17(%arg0: i32) -> (i32, i32) {
    %c0_i32 = arith.constant 0 : i32
    %c0_i32_0 = arith.constant 0 : i32
    %c0_i32_1 = arith.constant 0 : i32
    return %c0_i32, %c0_i32_0 : i32, i32
  }
  func.func @transform_18(%arg0: i32) -> (i32, i32, i32) {
    %c0_i32 = arith.constant 0 : i32
    %c0_i32_0 = arith.constant 0 : i32
    %c0_i32_1 = arith.constant 0 : i32
    return %arg0, %c0_i32, %c0_i32_0 : i32, i32, i32
  }
}

</mosaic_0001>

<llo_original>
// kernel: tpu_custom_call.1
$region0: #{tpu_custom_call.1}
  #allocation0 [shape = 'u32[]', space=smem, size = 0x4, offset = 0x4, fixed_abs, tag = 'smem constant byte address 0x4 - core index']
  #allocation1 [shape = 'u32[144,128]{1,0:T(1,128)}', space=vmem, size = 0x12000, scoped, tag = 'internal scratch']
  %s0 = inlined_call_operand.vmem [shape: f32[2,4,256], index: 0, kind: input, shape index: {}]
  %s1 = inlined_call_operand.vmem [shape: f32[9,4,1], index: 1, kind: input, shape index: {}]
  %s2 = inlined_call_operand.vmem [shape: f32[4,4], index: 2, kind: input, shape index: {}]
  %s3 = inlined_call_operand.vmem [shape: f32[4,1], index: 3, kind: input, shape index: {}]
  %s4 = inlined_call_operand.vmem [shape: f32[9,4,1], index: 4, kind: input, shape index: {}]
  %s5 = inlined_call_operand.vmem [shape: f32[4,4], index: 5, kind: input, shape index: {}]
  %s6 = inlined_call_operand.vmem [shape: f32[4,1], index: 6, kind: input, shape index: {}]
  %s7 = inlined_call_operand.vmem [shape: f32[8,4], index: 7, kind: input, shape index: {}]
  %s8 = inlined_call_operand.vmem [shape: f32[8,1], index: 8, kind: input, shape index: {}]
  %s9 = inlined_call_operand.vmem [shape: f32[4,8], index: 9, kind: input, shape index: {}]
  %s10 = inlined_call_operand.vmem [shape: f32[4,1], index: 10, kind: input, shape index: {}]
  %s11 = inlined_call_operand.vmem [shape: f32[4,8], index: 11, kind: input, shape index: {}]
  %s12 = inlined_call_operand.vmem [shape: f32[4,1], index: 12, kind: input, shape index: {}]
  %s13 = inlined_call_operand.vmem [shape: f32[4,1,256], index: 13, kind: input, shape index: {}]
  %s14 = inlined_call_operand.vmem [shape: f32[256,16], index: 14, kind: input, shape index: {}]
  %s15 = inlined_call_operand.vmem [shape: f32[256,16], index: 15, kind: input, shape index: {}]
  %s16 = inlined_call_operand.vmem [shape: f32[16,256], index: 16, kind: input, shape index: {}]
  %s17 = inlined_call_operand.vmem [shape: f32[16,256], index: 17, kind: input, shape index: {}]
  %s18 = inlined_call_operand.hbm [shape: f32[2,4,256], index: 18, kind: output, shape index: {}]
  %s19 = sld [smem:[#allocation0]]
  $region105: #{tpu_custom_call.1} parent=0
    _
  %s21 = ssub.s32 1, %s19
  %s22 = scalar_select 0, %s21, %s19
  $region1: #{tpu_custom_call.1} parent=0
    #allocation2 [shape = 'u8[8192]{0}', space=vmem, size = 0x2000, scoped, tag = 'output window, operand 0']
    #allocation3 [shape = 's32[2]{0}', space=sflag, size = 0x8, scoped, tag = 'scoped memory for tpu_custom_call.1']
    %23 = vsyncpa [#allocation3], 0
    %s24 = scalar_lea.sflag [#allocation3], 1
    %25 = vsyncpa %s24, 0
    loop: start=0, step=1, limit=4
    $region2: #{tpu_custom_call.1} parent=1 // loop_pre_header
      _
    $region3: #{tpu_custom_call.1} parent=1 // loop_header
      %s27 = sphi 0, %s31
      %p28 = scmp.ge.s32.totalorder %s27, 4
      %s37 = sphi 0, %s39
      %s40 = sphi 0, %s37
      %s41 = sphi 0, %s40
      %s57 = sphi 0, %s41
      %s61 = sphi 0, %s61
      %s63 = sphi 0, %s61
      %s64 = sphi 0, %s63
      %s78 = sphi 0, %s64
      %s82 = sphi 0, %s82
      %s84 = sphi 0, %s82
      %s85 = sphi 0, %s84
      %s99 = sphi 0, %s85
      %s103 = sphi 0, %s103
      %s105 = sphi 0, %s103
      %s106 = sphi 0, %s105
      %s120 = sphi 0, %s106
      %s124 = sphi 0, %s124
      %s126 = sphi 0, %s124
      %s127 = sphi 0, %s126
      %s141 = sphi 0, %s127
      %s145 = sphi 0, %s145
      %s147 = sphi 0, %s145
      %s148 = sphi 0, %s147
      %s162 = sphi 0, %s148
      %s166 = sphi 0, %s166
      %s168 = sphi 0, %s166
      %s169 = sphi 0, %s168
      %s183 = sphi 0, %s169
      %s187 = sphi 0, %s187
      %s189 = sphi 0, %s187
      %s190 = sphi 0, %s189
      %s204 = sphi 0, %s190
      %s208 = sphi 0, %s208
      %s210 = sphi 0, %s208
      %s211 = sphi 0, %s210
      %s225 = sphi 0, %s211
      %s229 = sphi 0, %s229
      %s231 = sphi 0, %s229
      %s232 = sphi 0, %s231
      %s246 = sphi 0, %s232
      %s250 = sphi 0, %s250
      %s252 = sphi 0, %s250
      %s253 = sphi 0, %s252
      %s267 = sphi 0, %s253
      %s271 = sphi 0, %s271
      %s273 = sphi 0, %s271
      %s274 = sphi 0, %s273
      %s288 = sphi 0, %s274
      %s292 = sphi 0, %s292
      %s294 = sphi 0, %s292
      %s295 = sphi 0, %s294
      %s309 = sphi 0, %s295
      %s313 = sphi 0, %s313
      %s315 = sphi 0, %s313
      %s316 = sphi 0, %s315
      %s330 = sphi 0, %s316
      %s334 = sphi 0, %s334
      %s336 = sphi 0, %s334
      %s337 = sphi 0, %s336
      %s351 = sphi 0, %s337
      %s355 = sphi 0, %s355
      %s357 = sphi 0, %s355
      %s358 = sphi 0, %s357
      %s372 = sphi 0, %s358
      %s376 = sphi 0, %s376
      %s378 = sphi 0, %s376
      %s379 = sphi 0, %s378
      %s393 = sphi 0, %s379
      %s397 = sphi 0, %s397
      %s399 = sphi 0, %s397
      %s400 = sphi 0, %s399
      %s414 = sphi 0, %s400
      %s420 = sphi 0, %s422
      %s423 = sphi 0, %s420
      %s424 = sphi 0, %s423
      %s440 = sphi 0, %s424
    $region4: #{tpu_custom_call.1} parent=1 // loop_header_branch
      %30 = sbr.rel (%p28) target = $region8
    $region5: #{tpu_custom_call.1} parent=1 // loop_body
      %s32 = ssub.s32 %s27, 1
      %s33 = ssub.s32 %s27, 2
      %s34 = sadd.s32 %s27, 1
      %s35 = ssub.s32 %s27, %s34
      %p36 = scmp.eq.s32.totalorder %s35, 0
      %s38 = sadd.s32 %s37, 1
      %s39 = scalar_select %p36, %s37, %s38
      %p42 = pneg %p36
      %p43 = scmp.eq.s32.totalorder %s27, 1
      %p44 = por %p42, %p43
      %p45 = scmp.ne.s32.totalorder %s37, %s40
      %p46 = scmp.eq.s32.totalorder %s27, 0
      %p47 = por %p45, %p46
      %p48 = scmp.ne.s32.totalorder %s37, %s40
      %p49 = scmp.eq.s32.totalorder %s32, 1
      %p50 = por %p48, %p49
      %p51 = scmp.ne.s32.totalorder %s40, %s41
      %p52 = scmp.eq.s32.totalorder %s32, 0
      %p53 = por %p51, %p52
      %p54 = scmp.ne.s32.totalorder %s40, %s41
      %p55 = scmp.eq.s32.totalorder %s33, 1
      %p56 = por %p54, %p55
      %p58 = scmp.ne.s32.totalorder %s41, %s57
      %p59 = scmp.eq.s32.totalorder %s33, 0
      %p60 = por %p58, %p59
      %s62 = sadd.s32 %s61, 1
      %p65 = scmp.eq.s32.totalorder %s27, 1
      %p66 = scmp.ne.s32.totalorder %s61, %s63
      %p67 = scmp.eq.s32.totalorder %s27, 0
      %p68 = por %p66, %p67
      %p69 = scmp.ne.s32.totalorder %s61, %s63
      %p70 = scmp.eq.s32.totalorder %s32, 1
      %p71 = por %p69, %p70
      %p72 = scmp.ne.s32.totalorder %s63, %s64
      %p73 = scmp.eq.s32.totalorder %s32, 0
      %p74 = por %p72, %p73
      %p75 = scmp.ne.s32.totalorder %s63, %s64
      %p76 = scmp.eq.s32.totalorder %s33, 1
      %p77 = por %p75, %p76
      %p79 = scmp.ne.s32.totalorder %s64, %s78
      %p80 = scmp.eq.s32.totalorder %s33, 0
      %p81 = por %p79, %p80
      %s83 = sadd.s32 %s82, 1
      %p86 = scmp.eq.s32.totalorder %s27, 1
      %p87 = scmp.ne.s32.totalorder %s82, %s84
      %p88 = scmp.eq.s32.totalorder %s27, 0
      %p89 = por %p87, %p88
      %p90 = scmp.ne.s32.totalorder %s82, %s84
      %p91 = scmp.eq.s32.totalorder %s32, 1
      %p92 = por %p90, %p91
      %p93 = scmp.ne.s32.totalorder %s84, %s85
      %p94 = scmp.eq.s32.totalorder %s32, 0
      %p95 = por %p93, %p94
      %p96 = scmp.ne.s32.totalorder %s84, %s85
      %p97 = scmp.eq.s32.totalorder %s33, 1
      %p98 = por %p96, %p97
      %p100 = scmp.ne.s32.totalorder %s85, %s99
      %p101 = scmp.eq.s32.totalorder %s33, 0
      %p102 = por %p100, %p101
      %s104 = sadd.s32 %s103, 1
      %p107 = scmp.eq.s32.totalorder %s27, 1
      %p108 = scmp.ne.s32.totalorder %s103, %s105
      %p109 = scmp.eq.s32.totalorder %s27, 0
      %p110 = por %p108, %p109
      %p111 = scmp.ne.s32.totalorder %s103, %s105
      %p112 = scmp.eq.s32.totalorder %s32, 1
      %p113 = por %p111, %p112
      %p114 = scmp.ne.s32.totalorder %s105, %s106
      %p115 = scmp.eq.s32.totalorder %s32, 0
      %p116 = por %p114, %p115
      %p117 = scmp.ne.s32.totalorder %s105, %s106
      %p118 = scmp.eq.s32.totalorder %s33, 1
      %p119 = por %p117, %p118
      %p121 = scmp.ne.s32.totalorder %s106, %s120
      %p122 = scmp.eq.s32.totalorder %s33, 0
      %p123 = por %p121, %p122
      %s125 = sadd.s32 %s124, 1
      %p128 = scmp.eq.s32.totalorder %s27, 1
      %p129 = scmp.ne.s32.totalorder %s124, %s126
      %p130 = scmp.eq.s32.totalorder %s27, 0
      %p131 = por %p129, %p130
      %p132 = scmp.ne.s32.totalorder %s124, %s126
      %p133 = scmp.eq.s32.totalorder %s32, 1
      %p134 = por %p132, %p133
      %p135 = scmp.ne.s32.totalorder %s126, %s127
      %p136 = scmp.eq.s32.totalorder %s32, 0
      %p137 = por %p135, %p136
      %p138 = scmp.ne.s32.totalorder %s126, %s127
      %p139 = scmp.eq.s32.totalorder %s33, 1
      %p140 = por %p138, %p139
      %p142 = scmp.ne.s32.totalorder %s127, %s141
      %p143 = scmp.eq.s32.totalorder %s33, 0
      %p144 = por %p142, %p143
      %s146 = sadd.s32 %s145, 1
      %p149 = scmp.eq.s32.totalorder %s27, 1
      %p150 = scmp.ne.s32.totalorder %s145, %s147
      %p151 = scmp.eq.s32.totalorder %s27, 0
      %p152 = por %p150, %p151
      %p153 = scmp.ne.s32.totalorder %s145, %s147
      %p154 = scmp.eq.s32.totalorder %s32, 1
      %p155 = por %p153, %p154
      %p156 = scmp.ne.s32.totalorder %s147, %s148
      %p157 = scmp.eq.s32.totalorder %s32, 0
      %p158 = por %p156, %p157
      %p159 = scmp.ne.s32.totalorder %s147, %s148
      %p160 = scmp.eq.s32.totalorder %s33, 1
      %p161 = por %p159, %p160
      %p163 = scmp.ne.s32.totalorder %s148, %s162
      %p164 = scmp.eq.s32.totalorder %s33, 0
      %p165 = por %p163, %p164
      %s167 = sadd.s32 %s166, 1
      %p170 = scmp.eq.s32.totalorder %s27, 1
      %p171 = scmp.ne.s32.totalorder %s166, %s168
      %p172 = scmp.eq.s32.totalorder %s27, 0
      %p173 = por %p171, %p172
      %p174 = scmp.ne.s32.totalorder %s166, %s168
      %p175 = scmp.eq.s32.totalorder %s32, 1
      %p176 = por %p174, %p175
      %p177 = scmp.ne.s32.totalorder %s168, %s169
      %p178 = scmp.eq.s32.totalorder %s32, 0
      %p179 = por %p177, %p178
      %p180 = scmp.ne.s32.totalorder %s168, %s169
      %p181 = scmp.eq.s32.totalorder %s33, 1
      %p182 = por %p180, %p181
      %p184 = scmp.ne.s32.totalorder %s169, %s183
      %p185 = scmp.eq.s32.totalorder %s33, 0
      %p186 = por %p184, %p185
      %s188 = sadd.s32 %s187, 1
      %p191 = scmp.eq.s32.totalorder %s27, 1
      %p192 = scmp.ne.s32.totalorder %s187, %s189
      %p193 = scmp.eq.s32.totalorder %s27, 0
      %p194 = por %p192, %p193
      %p195 = scmp.ne.s32.totalorder %s187, %s189
      %p196 = scmp.eq.s32.totalorder %s32, 1
      %p197 = por %p195, %p196
      %p198 = scmp.ne.s32.totalorder %s189, %s190
      %p199 = scmp.eq.s32.totalorder %s32, 0
      %p200 = por %p198, %p199
      %p201 = scmp.ne.s32.totalorder %s189, %s190
      %p202 = scmp.eq.s32.totalorder %s33, 1
      %p203 = por %p201, %p202
      %p205 = scmp.ne.s32.totalorder %s190, %s204
      %p206 = scmp.eq.s32.totalorder %s33, 0
      %p207 = por %p205, %p206
      %s209 = sadd.s32 %s208, 1
      %p212 = scmp.eq.s32.totalorder %s27, 1
      %p213 = scmp.ne.s32.totalorder %s208, %s210
      %p214 = scmp.eq.s32.totalorder %s27, 0
      %p215 = por %p213, %p214
      %p216 = scmp.ne.s32.totalorder %s208, %s210
      %p217 = scmp.eq.s32.totalorder %s32, 1
      %p218 = por %p216, %p217
      %p219 = scmp.ne.s32.totalorder %s210, %s211
      %p220 = scmp.eq.s32.totalorder %s32, 0
      %p221 = por %p219, %p220
      %p222 = scmp.ne.s32.totalorder %s210, %s211
      %p223 = scmp.eq.s32.totalorder %s33, 1
      %p224 = por %p222, %p223
      %p226 = scmp.ne.s32.totalorder %s211, %s225
      %p227 = scmp.eq.s32.totalorder %s33, 0
      %p228 = por %p226, %p227
      %s230 = sadd.s32 %s229, 1
      %p233 = scmp.eq.s32.totalorder %s27, 1
      %p234 = scmp.ne.s32.totalorder %s229, %s231
      %p235 = scmp.eq.s32.totalorder %s27, 0
      %p236 = por %p234, %p235
      %p237 = scmp.ne.s32.totalorder %s229, %s231
      %p238 = scmp.eq.s32.totalorder %s32, 1
      %p239 = por %p237, %p238
      %p240 = scmp.ne.s32.totalorder %s231, %s232
      %p241 = scmp.eq.s32.totalorder %s32, 0
      %p242 = por %p240, %p241
      %p243 = scmp.ne.s32.totalorder %s231, %s232
      %p244 = scmp.eq.s32.totalorder %s33, 1
      %p245 = por %p243, %p244
      %p247 = scmp.ne.s32.totalorder %s232, %s246
      %p248 = scmp.eq.s32.totalorder %s33, 0
      %p249 = por %p247, %p248
      %s251 = sadd.s32 %s250, 1
      %p254 = scmp.eq.s32.totalorder %s27, 1
      %p255 = scmp.ne.s32.totalorder %s250, %s252
      %p256 = scmp.eq.s32.totalorder %s27, 0
      %p257 = por %p255, %p256
      %p258 = scmp.ne.s32.totalorder %s250, %s252
      %p259 = scmp.eq.s32.totalorder %s32, 1
      %p260 = por %p258, %p259
      %p261 = scmp.ne.s32.totalorder %s252, %s253
      %p262 = scmp.eq.s32.totalorder %s32, 0
      %p263 = por %p261, %p262
      %p264 = scmp.ne.s32.totalorder %s252, %s253
      %p265 = scmp.eq.s32.totalorder %s33, 1
      %p266 = por %p264, %p265
      %p268 = scmp.ne.s32.totalorder %s253, %s267
      %p269 = scmp.eq.s32.totalorder %s33, 0
      %p270 = por %p268, %p269
      %s272 = sadd.s32 %s271, 1
      %p275 = scmp.eq.s32.totalorder %s27, 1
      %p276 = scmp.ne.s32.totalorder %s271, %s273
      %p277 = scmp.eq.s32.totalorder %s27, 0
      %p278 = por %p276, %p277
      %p279 = scmp.ne.s32.totalorder %s271, %s273
      %p280 = scmp.eq.s32.totalorder %s32, 1
      %p281 = por %p279, %p280
      %p282 = scmp.ne.s32.totalorder %s273, %s274
      %p283 = scmp.eq.s32.totalorder %s32, 0
      %p284 = por %p282, %p283
      %p285 = scmp.ne.s32.totalorder %s273, %s274
      %p286 = scmp.eq.s32.totalorder %s33, 1
      %p287 = por %p285, %p286
      %p289 = scmp.ne.s32.totalorder %s274, %s288
      %p290 = scmp.eq.s32.totalorder %s33, 0
      %p291 = por %p289, %p290
      %s293 = sadd.s32 %s292, 1
      %p296 = scmp.eq.s32.totalorder %s27, 1
      %p297 = scmp.ne.s32.totalorder %s292, %s294
      %p298 = scmp.eq.s32.totalorder %s27, 0
      %p299 = por %p297, %p298
      %p300 = scmp.ne.s32.totalorder %s292, %s294
      %p301 = scmp.eq.s32.totalorder %s32, 1
      %p302 = por %p300, %p301
      %p303 = scmp.ne.s32.totalorder %s294, %s295
      %p304 = scmp.eq.s32.totalorder %s32, 0
      %p305 = por %p303, %p304
      %p306 = scmp.ne.s32.totalorder %s294, %s295
      %p307 = scmp.eq.s32.totalorder %s33, 1
      %p308 = por %p306, %p307
      %p310 = scmp.ne.s32.totalorder %s295, %s309
      %p311 = scmp.eq.s32.totalorder %s33, 0
      %p312 = por %p310, %p311
      %s314 = sadd.s32 %s313, 1
      %p317 = scmp.eq.s32.totalorder %s27, 1
      %p318 = scmp.ne.s32.totalorder %s313, %s315
      %p319 = scmp.eq.s32.totalorder %s27, 0
      %p320 = por %p318, %p319
      %p321 = scmp.ne.s32.totalorder %s313, %s315
      %p322 = scmp.eq.s32.totalorder %s32, 1
      %p323 = por %p321, %p322
      %p324 = scmp.ne.s32.totalorder %s315, %s316
      %p325 = scmp.eq.s32.totalorder %s32, 0
      %p326 = por %p324, %p325
      %p327 = scmp.ne.s32.totalorder %s315, %s316
      %p328 = scmp.eq.s32.totalorder %s33, 1
      %p329 = por %p327, %p328
      %p331 = scmp.ne.s32.totalorder %s316, %s330
      %p332 = scmp.eq.s32.totalorder %s33, 0
      %p333 = por %p331, %p332
      %s335 = sadd.s32 %s334, 1
      %p338 = scmp.eq.s32.totalorder %s27, 1
      %p339 = scmp.ne.s32.totalorder %s334, %s336
      %p340 = scmp.eq.s32.totalorder %s27, 0
      %p341 = por %p339, %p340
      %p342 = scmp.ne.s32.totalorder %s334, %s336
      %p343 = scmp.eq.s32.totalorder %s32, 1
      %p344 = por %p342, %p343
      %p345 = scmp.ne.s32.totalorder %s336, %s337
      %p346 = scmp.eq.s32.totalorder %s32, 0
      %p347 = por %p345, %p346
      %p348 = scmp.ne.s32.totalorder %s336, %s337
      %p349 = scmp.eq.s32.totalorder %s33, 1
      %p350 = por %p348, %p349
      %p352 = scmp.ne.s32.totalorder %s337, %s351
      %p353 = scmp.eq.s32.totalorder %s33, 0
      %p354 = por %p352, %p353
      %s356 = sadd.s32 %s355, 1
      %p359 = scmp.eq.s32.totalorder %s27, 1
      %p360 = scmp.ne.s32.totalorder %s355, %s357
      %p361 = scmp.eq.s32.totalorder %s27, 0
      %p362 = por %p360, %p361
      %p363 = scmp.ne.s32.totalorder %s355, %s357
      %p364 = scmp.eq.s32.totalorder %s32, 1
      %p365 = por %p363, %p364
      %p366 = scmp.ne.s32.totalorder %s357, %s358
      %p367 = scmp.eq.s32.totalorder %s32, 0
      %p368 = por %p366, %p367
      %p369 = scmp.ne.s32.totalorder %s357, %s358
      %p370 = scmp.eq.s32.totalorder %s33, 1
      %p371 = por %p369, %p370
      %p373 = scmp.ne.s32.totalorder %s358, %s372
      %p374 = scmp.eq.s32.totalorder %s33, 0
      %p375 = por %p373, %p374
      %s377 = sadd.s32 %s376, 1
      %p380 = scmp.eq.s32.totalorder %s27, 1
      %p381 = scmp.ne.s32.totalorder %s376, %s378
      %p382 = scmp.eq.s32.totalorder %s27, 0
      %p383 = por %p381, %p382
      %p384 = scmp.ne.s32.totalorder %s376, %s378
      %p385 = scmp.eq.s32.totalorder %s32, 1
      %p386 = por %p384, %p385
      %p387 = scmp.ne.s32.totalorder %s378, %s379
      %p388 = scmp.eq.s32.totalorder %s32, 0
      %p389 = por %p387, %p388
      %p390 = scmp.ne.s32.totalorder %s378, %s379
      %p391 = scmp.eq.s32.totalorder %s33, 1
      %p392 = por %p390, %p391
      %p394 = scmp.ne.s32.totalorder %s379, %s393
      %p395 = scmp.eq.s32.totalorder %s33, 0
      %p396 = por %p394, %p395
      %s398 = sadd.s32 %s397, 1
      %p401 = scmp.eq.s32.totalorder %s27, 1
      %p402 = scmp.ne.s32.totalorder %s397, %s399
      %p403 = scmp.eq.s32.totalorder %s27, 0
      %p404 = por %p402, %p403
      %p405 = scmp.ne.s32.totalorder %s397, %s399
      %p406 = scmp.eq.s32.totalorder %s32, 1
      %p407 = por %p405, %p406
      %p408 = scmp.ne.s32.totalorder %s399, %s400
      %p409 = scmp.eq.s32.totalorder %s32, 0
      %p410 = por %p408, %p409
      %p411 = scmp.ne.s32.totalorder %s399, %s400
      %p412 = scmp.eq.s32.totalorder %s33, 1
      %p413 = por %p411, %p412
      %p415 = scmp.ne.s32.totalorder %s400, %s414
      %p416 = scmp.eq.s32.totalorder %s33, 0
      %p417 = por %p415, %p416
      %s418 = ssub.s32 %s27, %s34
      %p419 = scmp.eq.s32.totalorder %s418, 0
      %s421 = sadd.s32 %s420, 1
      %s422 = scalar_select %p419, %s420, %s421
      %p425 = pneg %p419
      %p426 = scmp.eq.s32.totalorder %s27, 1
      %p427 = por %p425, %p426
      %p428 = scmp.ne.s32.totalorder %s420, %s423
      %p429 = scmp.eq.s32.totalorder %s27, 0
      %p430 = por %p428, %p429
      %p431 = scmp.ne.s32.totalorder %s420, %s423
      %p432 = scmp.eq.s32.totalorder %s32, 1
      %p433 = por %p431, %p432
      %p434 = scmp.ne.s32.totalorder %s423, %s424
      %p435 = scmp.eq.s32.totalorder %s32, 0
      %p436 = por %p434, %p435
      %p437 = scmp.ne.s32.totalorder %s423, %s424
      %p438 = scmp.eq.s32.totalorder %s33, 1
      %p439 = por %p437, %p438
      %p441 = scmp.ne.s32.totalorder %s424, %s440
      %p442 = scmp.eq.s32.totalorder %s33, 0
      %p443 = por %p441, %p442
      %p444 = scmp.le.s32.totalorder 1, %s27
      %p445 = scmp.lt.s32.totalorder %s27, 3
      %p446 = pnand %p444, %p445
      %p447 = pneg %p446
      // Predicated region
      $region9: #{tpu_custom_call.1} parent=5 // pred_check
        _
      $region10: #{tpu_custom_call.1} parent=5 // pred_check_branch
        %449 = sbr.rel (%p446) target = $region12
      $region11: #{tpu_custom_call.1} parent=5 // pred_region
        %s450 = ssub.s32 %s27, 1
        // Predicated region
        $region13: #{tpu_custom_call.1} parent=11 // pred_check
          %p451 = pneg %p74
        $region14: #{tpu_custom_call.1} parent=11 // pred_check_branch
          %453 = sbr.rel (%p451) target = $region16
        $region15: #{tpu_custom_call.1} parent=11 // pred_region
          _
        $region16: #{tpu_custom_call.1} parent=11 // pred_fallthru
          _
        // Predicated region
        $region17: #{tpu_custom_call.1} parent=11 // pred_check
          %p454 = pneg %p95
        $region18: #{tpu_custom_call.1} parent=11 // pred_check_branch
          %456 = sbr.rel (%p454) target = $region20
        $region19: #{tpu_custom_call.1} parent=11 // pred_region
          _
        $region20: #{tpu_custom_call.1} parent=11 // pred_fallthru
          _
        // Predicated region
        $region21: #{tpu_custom_call.1} parent=11 // pred_check
          %p457 = pneg %p116
        $region22: #{tpu_custom_call.1} parent=11 // pred_check_branch
          %459 = sbr.rel (%p457) target = $region24
        $region23: #{tpu_custom_call.1} parent=11 // pred_region
          _
        $region24: #{tpu_custom_call.1} parent=11 // pred_fallthru
          _
        // Predicated region
        $region25: #{tpu_custom_call.1} parent=11 // pred_check
          %p460 = pneg %p137
        $region26: #{tpu_custom_call.1} parent=11 // pred_check_branch
          %462 = sbr.rel (%p460) target = $region28
        $region27: #{tpu_custom_call.1} parent=11 // pred_region
          _
        $region28: #{tpu_custom_call.1} parent=11 // pred_fallthru
          _
        // Predicated region
        $region29: #{tpu_custom_call.1} parent=11 // pred_check
          %p463 = pneg %p158
        $region30: #{tpu_custom_call.1} parent=11 // pred_check_branch
          %465 = sbr.rel (%p463) target = $region32
        $region31: #{tpu_custom_call.1} parent=11 // pred_region
          _
        $region32: #{tpu_custom_call.1} parent=11 // pred_fallthru
          _
        // Predicated region
        $region33: #{tpu_custom_call.1} parent=11 // pred_check
          %p466 = pneg %p179
        $region34: #{tpu_custom_call.1} parent=11 // pred_check_branch
          %468 = sbr.rel (%p466) target = $region36
        $region35: #{tpu_custom_call.1} parent=11 // pred_region
          _
        $region36: #{tpu_custom_call.1} parent=11 // pred_fallthru
          _
        // Predicated region
        $region37: #{tpu_custom_call.1} parent=11 // pred_check
          %p469 = pneg %p200
        $region38: #{tpu_custom_call.1} parent=11 // pred_check_branch
          %471 = sbr.rel (%p469) target = $region40
        $region39: #{tpu_custom_call.1} parent=11 // pred_region
          _
        $region40: #{tpu_custom_call.1} parent=11 // pred_fallthru
          _
        // Predicated region
        $region41: #{tpu_custom_call.1} parent=11 // pred_check
          %p472 = pneg %p221
        $region42: #{tpu_custom_call.1} parent=11 // pred_check_branch
          %474 = sbr.rel (%p472) target = $region44
        $region43: #{tpu_custom_call.1} parent=11 // pred_region
          _
        $region44: #{tpu_custom_call.1} parent=11 // pred_fallthru
          _
        // Predicated region
        $region45: #{tpu_custom_call.1} parent=11 // pred_check
          %p475 = pneg %p242
        $region46: #{tpu_custom_call.1} parent=11 // pred_check_branch
          %477 = sbr.rel (%p475) target = $region48
        $region47: #{tpu_custom_call.1} parent=11 // pred_region
          _
        $region48: #{tpu_custom_call.1} parent=11 // pred_fallthru
          _
        // Predicated region
        $region49: #{tpu_custom_call.1} parent=11 // pred_check
          %p478 = pneg %p263
        $region50: #{tpu_custom_call.1} parent=11 // pred_check_branch
          %480 = sbr.rel (%p478) target = $region52
        $region51: #{tpu_custom_call.1} parent=11 // pred_region
          _
        $region52: #{tpu_custom_call.1} parent=11 // pred_fallthru
          _
        // Predicated region
        $region53: #{tpu_custom_call.1} parent=11 // pred_check
          %p481 = pneg %p284
        $region54: #{tpu_custom_call.1} parent=11 // pred_check_branch
          %483 = sbr.rel (%p481) target = $region56
        $region55: #{tpu_custom_call.1} parent=11 // pred_region
          _
        $region56: #{tpu_custom_call.1} parent=11 // pred_fallthru
          _
        // Predicated region
        $region57: #{tpu_custom_call.1} parent=11 // pred_check
          %p484 = pneg %p305
        $region58: #{tpu_custom_call.1} parent=11 // pred_check_branch
          %486 = sbr.rel (%p484) target = $region60
        $region59: #{tpu_custom_call.1} parent=11 // pred_region
          _
        $region60: #{tpu_custom_call.1} parent=11 // pred_fallthru
          _
        // Predicated region
        $region61: #{tpu_custom_call.1} parent=11 // pred_check
          %p487 = pneg %p326
        $region62: #{tpu_custom_call.1} parent=11 // pred_check_branch
          %489 = sbr.rel (%p487) target = $region64
        $region63: #{tpu_custom_call.1} parent=11 // pred_region
          _
        $region64: #{tpu_custom_call.1} parent=11 // pred_fallthru
          _
        // Predicated region
        $region65: #{tpu_custom_call.1} parent=11 // pred_check
          %p490 = pneg %p347
        $region66: #{tpu_custom_call.1} parent=11 // pred_check_branch
          %492 = sbr.rel (%p490) target = $region68
        $region67: #{tpu_custom_call.1} parent=11 // pred_region
          _
        $region68: #{tpu_custom_call.1} parent=11 // pred_fallthru
          _
        // Predicated region
        $region69: #{tpu_custom_call.1} parent=11 // pred_check
          %p493 = pneg %p368
        $region70: #{tpu_custom_call.1} parent=11 // pred_check_branch
          %495 = sbr.rel (%p493) target = $region72
        $region71: #{tpu_custom_call.1} parent=11 // pred_region
          _
        $region72: #{tpu_custom_call.1} parent=11 // pred_fallthru
          _
        // Predicated region
        $region73: #{tpu_custom_call.1} parent=11 // pred_check
          %p496 = pneg %p389
        $region74: #{tpu_custom_call.1} parent=11 // pred_check_branch
          %498 = sbr.rel (%p496) target = $region76
        $region75: #{tpu_custom_call.1} parent=11 // pred_region
          _
        $region76: #{tpu_custom_call.1} parent=11 // pred_fallthru
          _
        // Predicated region
        $region77: #{tpu_custom_call.1} parent=11 // pred_check
          %p499 = pneg %p410
        $region78: #{tpu_custom_call.1} parent=11 // pred_check_branch
          %501 = sbr.rel (%p499) target = $region80
        $region79: #{tpu_custom_call.1} parent=11 // pred_region
          _
        $region80: #{tpu_custom_call.1} parent=11 // pred_fallthru
          _
      $region12: #{tpu_custom_call.1} parent=5 // pred_fallthru
        _
      %p502 = scmp.lt.s32.totalorder %s27, 2
      // Predicated region
      $region81: #{tpu_custom_call.1} parent=5 // pred_check
        %p503 = pneg %p502
      $region82: #{tpu_custom_call.1} parent=5 // pred_check_branch
        %505 = sbr.rel (%p503) target = $region84
      $region83: #{tpu_custom_call.1} parent=5 // pred_region
        // Predicated region
        $region85: #{tpu_custom_call.1} parent=83 // pred_check
          %p506 = pneg %p47
        $region86: #{tpu_custom_call.1} parent=83 // pred_check_branch
          %508 = sbr.rel (%p506) target = $region88
        $region87: #{tpu_custom_call.1} parent=83 // pred_region
          %p509 = scmp.lt.s32.totalorder %s27, 1
          %s510 = scalar_select %p509, %s27, 1
          %s511 = smul.addr %s510, 2
          %s512 = smul.addr %s511, 4
          %s513 = scalar_lea.vmem %s0, %s512
        $region88: #{tpu_custom_call.1} parent=83 // pred_fallthru
          _
      $region84: #{tpu_custom_call.1} parent=5 // pred_fallthru
        _
      %p514 = scmp.le.s32.totalorder 1, %s27
      %p515 = scmp.lt.s32.totalorder %s27, 3
      %p516 = pnand %p514, %p515
      %p517 = pneg %p516
      // Predicated region
      $region89: #{tpu_custom_call.1} parent=5 // pred_check
        _
      $region90: #{tpu_custom_call.1} parent=5 // pred_check_branch
        %519 = sbr.rel (%p516) target = $region92
      $region91: #{tpu_custom_call.1} parent=5 // pred_region
        %s520 = ssub.s32 %s27, 1
        %p521 = scmp.lt.s32.totalorder %s32, 1
        %s522 = scalar_select %p521, %s32, 1
        %s523 = smul.addr %s522, 2
        %s524 = smul.addr %s523, 4
        %s525 = scalar_lea.vmem %s0, %s524
        %p526 = pneg %p53
        %p527 = pneg %p50
        %p528 = pneg %p74
        %p529 = pneg %p71
        %p530 = pneg %p95
        %p531 = pneg %p92
        %p532 = pneg %p116
        %p533 = pneg %p113
        %p534 = pneg %p137
        %p535 = pneg %p134
        %p536 = pneg %p158
        %p537 = pneg %p155
        %p538 = pneg %p179
        %p539 = pneg %p176
        %p540 = pneg %p200
        %p541 = pneg %p197
        %p542 = pneg %p221
        %p543 = pneg %p218
        %p544 = pneg %p242
        %p545 = pneg %p239
        %p546 = pneg %p263
        %p547 = pneg %p260
        %p548 = pneg %p284
        %p549 = pneg %p281
        %p550 = pneg %p305
        %p551 = pneg %p302
        %p552 = pneg %p326
        %p553 = pneg %p323
        %p554 = pneg %p347
        %p555 = pneg %p344
        %p556 = pneg %p368
        %p557 = pneg %p365
        %p558 = pneg %p389
        %p559 = pneg %p386
        %p560 = pneg %p410
        %p561 = pneg %p407
        %p562 = pneg %p436
        %p563 = pneg %p433
        %s564 = sand.u32 %s423, 1
        %s565 = scalar_lea.sflag [#allocation3], %s564
        %s566 = sand.u32 %s423, 1
        %s567 = smul.addr %s566, 8
        %s568 = scalar_lea.vmem [#allocation2], %s567
        %p569 = scmp.lt.s32.totalorder %s32, 1
        %s570 = scalar_select %p569, %s32, 1
        %s571 = smul.addr %s570, 2
        %s572 = smul.addr %s571, 4
        %s573 = scalar_lea.vmem %s0, %s572
        %v574 = vld [vmem:[%s573] sm:$0xff]
        %v575 = vld [vmem:[%s13] sm:$0x3]
        %v576 = vld [vmem:[%s13 + $0x2] sm:$0x3]
        %v577 = vld [vmem:[%s13 + $0x4] sm:$0x3]
        %v578 = vld [vmem:[%s13 + $0x6] sm:$0x3]
        %v579 = vld [vmem:[%s1] sm:$0xf]
        %v580 = vld [vmem:[%s1 + $0x4] sm:$0xf]
        %v581 = vld [vmem:[%s1 + $0x8] sm:$0xf]
        %v582 = vld [vmem:[%s1 + $0xc] sm:$0xf]
        %v583 = vld [vmem:[%s1 + $0x10] sm:$0xf]
        %v584 = vld [vmem:[%s1 + $0x14] sm:$0xf]
        %v585 = vld [vmem:[%s1 + $0x18] sm:$0xf]
        %v586 = vld [vmem:[%s1 + $0x1c] sm:$0xf]
        %v587 = vld [vmem:[%s1 + $0x20] sm:$0xf]
        %v589 = vcombine.high %v574, %v574
        %591 = vrot.lane.b32.xlu0 %v574, 1
        %v592 = vpop.permute.xlu0 %591
        %593 = vrot.lane.b32.xlu0 %v589, 1
        %v594 = vpop.permute.xlu0 %593
        %v595 = vlaneseq
        %v596 = vand.u32 %v595, 127
        %vm597 = vcmp.lt.s32.totalorder %v596, 1
        %v598 = vsel %vm597, %v592, %v594
        %v599 = vsel %vm597, %v594, %v592
        %v601 = vlaneseq
        %v602 = vshrl.u32 %v601, 7
        %v603 = vsub.s32 0, %v602
        %v604 = vrot.slane %v575, %v603
        %v605 = vlaneseq
        %v606 = vshrl.u32 %v605, 7
        %v607 = vsub.s32 1, %v606
        %v608 = vrot.slane %v575, %v607
        %v611 = vmul.f32 %v599, %v604
        %v612 = vmul.f32 %v598, %v608
        %613 = vrot.lane.b32.xlu0 %v574, 127
        %v614 = vpop.permute.xlu0 %613
        %615 = vrot.lane.b32.xlu0 %v589, 127
        %v616 = vpop.permute.xlu0 %615
        %vm617 = vcmp.lt.s32.totalorder %v596, 127
        %v618 = vsel %vm617, %v614, %v616
        %v619 = vsel %vm617, %v616, %v614
        %v621 = vlaneseq
        %v622 = vshrl.u32 %v621, 7
        %v623 = vsub.s32 0, %v622
        %v624 = vrot.slane %v576, %v623
        %v625 = vlaneseq
        %v626 = vshrl.u32 %v625, 7
        %v627 = vsub.s32 1, %v626
        %v628 = vrot.slane %v576, %v627
        %v631 = vmul.f32 %v618, %v624
        %v632 = vmul.f32 %v619, %v628
        %634 = vset.pattern.permute.xlu0 0
        %635 = vperm.xlu0 %634, %v582
        %v636 = vpop.permute.xlu0 %635
        %v638 = vmul.f32 %v636, %v611
        %v639 = vmul.f32 %v636, %v612
        %641 = vset.pattern.permute.xlu0 0
        %642 = vperm.xlu0 %641, %v583
        %v643 = vpop.permute.xlu0 %642
        %v645 = vmul.f32 %v643, %v574
        %v646 = vmul.f32 %v643, %v589
        %v647 = vadd.f32 %v638, %v645
        %v648 = vadd.f32 %v639, %v646
        %650 = vset.pattern.permute.xlu0 0
        %651 = vperm.xlu0 %650, %v584
        %v652 = vpop.permute.xlu0 %651
        %v654 = vmul.f32 %v652, %v631
        %v655 = vmul.f32 %v652, %v632
        %v656 = vadd.f32 %v647, %v654
        %v657 = vadd.f32 %v648, %v655
        %658 = vrot.lane.b32.xlu0 %v611, 16
        %v659 = vpop.permute.xlu0 %658
        %660 = vrot.lane.b32.xlu0 %v612, 16
        %v661 = vpop.permute.xlu0 %660
        %vm662 = vcmp.lt.s32.totalorder %v596, 16
        %v663 = vsel %vm662, %v659, %v661
        %v664 = vsel %vm662, %v661, %v659
        %665 = vrot.lane.b32.xlu0 %v574, 16
        %v666 = vpop.permute.xlu0 %665
        %667 = vrot.lane.b32.xlu0 %v589, 16
        %v668 = vpop.permute.xlu0 %667
        %v669 = vsel %vm662, %v666, %v668
        %v670 = vsel %vm662, %v668, %v666
        %671 = vrot.lane.b32.xlu0 %v631, 16
        %v672 = vpop.permute.xlu0 %671
        %673 = vrot.lane.b32.xlu0 %v632, 16
        %v674 = vpop.permute.xlu0 %673
        %v675 = vsel %vm662, %v672, %v674
        %v676 = vsel %vm662, %v674, %v672
        %678 = vset.pattern.permute.xlu0 0
        %679 = vperm.xlu0 %678, %v579
        %v680 = vpop.permute.xlu0 %679
        %v682 = vmul.f32 %v680, %v664
        %v683 = vmul.f32 %v680, %v663
        %685 = vset.pattern.permute.xlu0 0
        %686 = vperm.xlu0 %685, %v580
        %v687 = vpop.permute.xlu0 %686
        %v689 = vmul.f32 %v687, %v670
        %v690 = vmul.f32 %v687, %v669
        %v691 = vadd.f32 %v682, %v689
        %v692 = vadd.f32 %v683, %v690
        %694 = vset.pattern.permute.xlu0 0
        %695 = vperm.xlu0 %694, %v581
        %v696 = vpop.permute.xlu0 %695
        %v698 = vmul.f32 %v696, %v676
        %v699 = vmul.f32 %v696, %v675
        %v700 = vadd.f32 %v691, %v698
        %v701 = vadd.f32 %v692, %v699
        %v703 = vlaneseq
        %v704 = vshrl.u32 %v703, 7
        %v705 = vsub.s32 0, %v704
        %v706 = vrot.slane %v577, %v705
        %v707 = vlaneseq
        %v708 = vshrl.u32 %v707, 7
        %v709 = vsub.s32 1, %v708
        %v710 = vrot.slane %v577, %v709
        %v713 = vmul.f32 %v706, %v700
        %v714 = vmul.f32 %v710, %v701
        %v715 = vadd.f32 %v656, %v713
        %v716 = vadd.f32 %v657, %v714
        %717 = vrot.lane.b32.xlu0 %v611, 112
        %v718 = vpop.permute.xlu0 %717
        %719 = vrot.lane.b32.xlu0 %v612, 112
        %v720 = vpop.permute.xlu0 %719
        %vm721 = vcmp.lt.s32.totalorder %v596, 112
        %v722 = vsel %vm721, %v718, %v720
        %v723 = vsel %vm721, %v720, %v718
        %724 = vrot.lane.b32.xlu0 %v574, 112
        %v725 = vpop.permute.xlu0 %724
        %726 = vrot.lane.b32.xlu0 %v589, 112
        %v727 = vpop.permute.xlu0 %726
        %v728 = vsel %vm721, %v725, %v727
        %v729 = vsel %vm721, %v727, %v725
        %730 = vrot.lane.b32.xlu0 %v631, 112
        %v731 = vpop.permute.xlu0 %730
        %732 = vrot.lane.b32.xlu0 %v632, 112
        %v733 = vpop.permute.xlu0 %732
        %v734 = vsel %vm721, %v731, %v733
        %v735 = vsel %vm721, %v733, %v731
        %737 = vset.pattern.permute.xlu0 0
        %738 = vperm.xlu0 %737, %v585
        %v739 = vpop.permute.xlu0 %738
        %v741 = vmul.f32 %v739, %v722
        %v742 = vmul.f32 %v739, %v723
        %744 = vset.pattern.permute.xlu0 0
        %745 = vperm.xlu0 %744, %v586
        %v746 = vpop.permute.xlu0 %745
        %v748 = vmul.f32 %v746, %v728
        %v749 = vmul.f32 %v746, %v729
        %v750 = vadd.f32 %v741, %v748
        %v751 = vadd.f32 %v742, %v749
        %753 = vset.pattern.permute.xlu0 0
        %754 = vperm.xlu0 %753, %v587
        %v755 = vpop.permute.xlu0 %754
        %v757 = vmul.f32 %v755, %v734
        %v758 = vmul.f32 %v755, %v735
        %v759 = vadd.f32 %v750, %v757
        %v760 = vadd.f32 %v751, %v758
        %v762 = vlaneseq
        %v763 = vshrl.u32 %v762, 7
        %v764 = vsub.s32 0, %v763
        %v765 = vrot.slane %v578, %v764
        %v766 = vlaneseq
        %v767 = vshrl.u32 %v766, 7
        %v768 = vsub.s32 1, %v767
        %v769 = vrot.slane %v578, %v768
        %v772 = vmul.f32 %v765, %v759
        %v773 = vmul.f32 %v769, %v760
        %v774 = vadd.f32 %v715, %v772
        %v775 = vadd.f32 %v716, %v773
        %v776 = vld [vmem:[%s2] sm:$0xf]
        %v777 = vld [vmem:[%s3] sm:$0xf]
        %779 = vset.pattern.permute.xlu0 0
        %780 = vperm.xlu0 %779, %v777
        %v781 = vpop.permute.xlu0 %780
        %vm783 = vcmask 31744
        %v785 = vsel %vm783, %v776, 0
        %vm787 = vcmask 1043456
        %v789 = vsel %vm787, %v774, 0
        %v792 = vsel %vm787, %v775, 0
        %794 = vmatprep.subr.mxu0 %v792
        %795 = vmatpush1.msra.mxu0 %v789
        %796 = vmatprep.subr.mxu0 0.0
        %797 = vmatpush1.msra.mxu0 0.0
        %798 = vmatprep.subr.mxu0 0.0
        %799 = vmatpush1.msra.mxu0 0.0
        %800 = vmatprep.subr.mxu0 0.0
        %801 = vmatpush1.msra.mxu0 0.0
        %802 = vmatprep.subr.mxu0 0.0
        %803 = vmatpush1.msra.mxu0 0.0
        %804 = vmatprep.subr.mxu0 0.0
        %805 = vmatpush1.msra.mxu0 0.0
        %806 = vmatprep.subr.mxu0 0.0
        %807 = vmatpush1.msra.mxu0 0.0
        %808 = vmatprep.subr.mxu0 0.0
        %809 = vmatpush1.msra.mxu0 0.0
        %810 = vmatprep.subr.mxu0 0.0
        %811 = vmatpush1.msra.mxu0 0.0
        %812 = vmatprep.subr.mxu0 0.0
        %813 = vmatpush1.msra.mxu0 0.0
        %814 = vmatprep.subr.mxu0 0.0
        %815 = vmatpush1.msra.mxu0 0.0
        %816 = vmatprep.subr.mxu0 0.0
        %817 = vmatpush1.msra.mxu0 0.0
        %818 = vmatprep.subr.mxu0 0.0
        %819 = vmatpush1.msra.mxu0 0.0
        %820 = vmatprep.subr.mxu0 0.0
        %821 = vmatpush1.msra.mxu0 0.0
        %822 = vmatprep.subr.mxu0 0.0
        %823 = vmatpush1.msra.mxu0 0.0
        %824 = vmatprep.subr.mxu0 0.0
        %825 = vmatpush1.msra.mxu0 0.0
        %826 = vmatprep.subr.mxu0 0.0
        %827 = vmatpush1.msra.mxu0 0.0
        %828 = vmatprep.subr.mxu0 0.0
        %829 = vmatpush1.msra.mxu0 0.0
        %830 = vmatprep.subr.mxu0 0.0
        %831 = vmatpush1.msra.mxu0 0.0
        %832 = vmatprep.subr.mxu0 0.0
        %833 = vmatpush1.msra.mxu0 0.0
        %834 = vmatprep.subr.mxu0 0.0
        %835 = vmatpush1.msra.mxu0 0.0
        %836 = vmatprep.subr.mxu0 0.0
        %837 = vmatpush1.msra.mxu0 0.0
        %838 = vmatprep.subr.mxu0 0.0
        %839 = vmatpush1.msra.mxu0 0.0
        %840 = vmatprep.subr.mxu0 0.0
        %841 = vmatpush1.msra.mxu0 0.0
        %842 = vmatprep.subr.mxu0 0.0
        %843 = vmatpush1.msra.mxu0 0.0
        %844 = vmatprep.subr.mxu0 0.0
        %845 = vmatpush1.msra.mxu0 0.0
        %846 = vmatprep.subr.mxu0 0.0
        %847 = vmatpush1.msra.mxu0 0.0
        %848 = vmatprep.subr.mxu0 0.0
        %849 = vmatpush1.msra.mxu0 0.0
        %850 = vmatprep.subr.mxu0 0.0
        %851 = vmatpush1.msra.mxu0 0.0
        %852 = vmatprep.subr.mxu0 0.0
        %853 = vmatpush1.msra.mxu0 0.0
        %854 = vmatprep.subr.mxu0 0.0
        %855 = vmatpush1.msra.mxu0 0.0
        %856 = vmatprep.subr.mxu0 0.0
        %857 = vmatpush1.msra.mxu0 0.0
        %858 = vmatprep.mubr.f32.mxu0 0.0
        %859 = vmatmul.mubr.f32.gmra.mrb[0].mxu0 %v785
        %v860 = vpop.f32.mrb[0].mxu0
        %v861 = vadd.f32 %v781, %v860
        %v862 = vpop.f32.mrb[0].mxu0
        %v863 = vadd.f32 %v781, %v862
        %864 = vdwg.mxu0
        %v865 = vmax.f32 %v861, 0.0
        %v866 = vmax.f32 %v863, 0.0
        %v867 = vld [vmem:[%s4] sm:$0xf]
        %v868 = vld [vmem:[%s4 + $0x4] sm:$0xf]
        %v869 = vld [vmem:[%s4 + $0x8] sm:$0xf]
        %v870 = vld [vmem:[%s4 + $0xc] sm:$0xf]
        %v871 = vld [vmem:[%s4 + $0x10] sm:$0xf]
        %v872 = vld [vmem:[%s4 + $0x14] sm:$0xf]
        %v873 = vld [vmem:[%s4 + $0x18] sm:$0xf]
        %v874 = vld [vmem:[%s4 + $0x1c] sm:$0xf]
        %v875 = vld [vmem:[%s4 + $0x20] sm:$0xf]
        %876 = vrot.lane.b32.xlu0 %v865, 1
        %v877 = vpop.permute.xlu0 %876
        %878 = vrot.lane.b32.xlu0 %v866, 1
        %v879 = vpop.permute.xlu0 %878
        %v880 = vsel %vm597, %v877, %v879
        %v881 = vsel %vm597, %v879, %v877
        %v882 = vmul.f32 %v881, %v604
        %v883 = vmul.f32 %v880, %v608
        %884 = vrot.lane.b32.xlu0 %v865, 127
        %v885 = vpop.permute.xlu0 %884
        %886 = vrot.lane.b32.xlu0 %v866, 127
        %v887 = vpop.permute.xlu0 %886
        %v888 = vsel %vm617, %v885, %v887
        %v889 = vsel %vm617, %v887, %v885
        %v890 = vmul.f32 %v888, %v624
        %v891 = vmul.f32 %v889, %v628
        %893 = vset.pattern.permute.xlu0 0
        %894 = vperm.xlu0 %893, %v870
        %v895 = vpop.permute.xlu0 %894
        %v897 = vmul.f32 %v895, %v882
        %v898 = vmul.f32 %v895, %v883
        %900 = vset.pattern.permute.xlu0 0
        %901 = vperm.xlu0 %900, %v871
        %v902 = vpop.permute.xlu0 %901
        %v904 = vmul.f32 %v902, %v865
        %v905 = vmul.f32 %v902, %v866
        %v906 = vadd.f32 %v897, %v904
        %v907 = vadd.f32 %v898, %v905
        %909 = vset.pattern.permute.xlu0 0
        %910 = vperm.xlu0 %909, %v872
        %v911 = vpop.permute.xlu0 %910
        %v913 = vmul.f32 %v911, %v890
        %v914 = vmul.f32 %v911, %v891
        %v915 = vadd.f32 %v906, %v913
        %v916 = vadd.f32 %v907, %v914
        %917 = vrot.lane.b32.xlu0 %v882, 16
        %v918 = vpop.permute.xlu0 %917
        %919 = vrot.lane.b32.xlu0 %v883, 16
        %v920 = vpop.permute.xlu0 %919
        %v921 = vsel %vm662, %v918, %v920
        %v922 = vsel %vm662, %v920, %v918
        %923 = vrot.lane.b32.xlu0 %v865, 16
        %v924 = vpop.permute.xlu0 %923
        %925 = vrot.lane.b32.xlu0 %v866, 16
        %v926 = vpop.permute.xlu0 %925
        %v927 = vsel %vm662, %v924, %v926
        %v928 = vsel %vm662, %v926, %v924
        %929 = vrot.lane.b32.xlu0 %v890, 16
        %v930 = vpop.permute.xlu0 %929
        %931 = vrot.lane.b32.xlu0 %v891, 16
        %v932 = vpop.permute.xlu0 %931
        %v933 = vsel %vm662, %v930, %v932
        %v934 = vsel %vm662, %v932, %v930
        %936 = vset.pattern.permute.xlu0 0
        %937 = vperm.xlu0 %936, %v867
        %v938 = vpop.permute.xlu0 %937
        %v940 = vmul.f32 %v938, %v922
        %v941 = vmul.f32 %v938, %v921
        %943 = vset.pattern.permute.xlu0 0
        %944 = vperm.xlu0 %943, %v868
        %v945 = vpop.permute.xlu0 %944
        %v947 = vmul.f32 %v945, %v928
        %v948 = vmul.f32 %v945, %v927
        %v949 = vadd.f32 %v940, %v947
        %v950 = vadd.f32 %v941, %v948
        %952 = vset.pattern.permute.xlu0 0
        %953 = vperm.xlu0 %952, %v869
        %v954 = vpop.permute.xlu0 %953
        %v956 = vmul.f32 %v954, %v934
        %v957 = vmul.f32 %v954, %v933
        %v958 = vadd.f32 %v949, %v956
        %v959 = vadd.f32 %v950, %v957
        %v960 = vmul.f32 %v706, %v958
        %v961 = vmul.f32 %v710, %v959
        %v962 = vadd.f32 %v915, %v960
        %v963 = vadd.f32 %v916, %v961
        %964 = vrot.lane.b32.xlu0 %v882, 112
        %v965 = vpop.permute.xlu0 %964
        %966 = vrot.lane.b32.xlu0 %v883, 112
        %v967 = vpop.permute.xlu0 %966
        %v968 = vsel %vm721, %v965, %v967
        %v969 = vsel %vm721, %v967, %v965
        %970 = vrot.lane.b32.xlu0 %v865, 112
        %v971 = vpop.permute.xlu0 %970
        %972 = vrot.lane.b32.xlu0 %v866, 112
        %v973 = vpop.permute.xlu0 %972
        %v974 = vsel %vm721, %v971, %v973
        %v975 = vsel %vm721, %v973, %v971
        %976 = vrot.lane.b32.xlu0 %v890, 112
        %v977 = vpop.permute.xlu0 %976
        %978 = vrot.lane.b32.xlu0 %v891, 112
        %v979 = vpop.permute.xlu0 %978
        %v980 = vsel %vm721, %v977, %v979
        %v981 = vsel %vm721, %v979, %v977
        %983 = vset.pattern.permute.xlu0 0
        %984 = vperm.xlu0 %983, %v873
        %v985 = vpop.permute.xlu0 %984
        %v987 = vmul.f32 %v985, %v968
        %v988 = vmul.f32 %v985, %v969
        %990 = vset.pattern.permute.xlu0 0
        %991 = vperm.xlu0 %990, %v874
        %v992 = vpop.permute.xlu0 %991
        %v994 = vmul.f32 %v992, %v974
        %v995 = vmul.f32 %v992, %v975
        %v996 = vadd.f32 %v987, %v994
        %v997 = vadd.f32 %v988, %v995
        %999 = vset.pattern.permute.xlu0 0
        %1000 = vperm.xlu0 %999, %v875
        %v1001 = vpop.permute.xlu0 %1000
        %v1003 = vmul.f32 %v1001, %v980
        %v1004 = vmul.f32 %v1001, %v981
        %v1005 = vadd.f32 %v996, %v1003
        %v1006 = vadd.f32 %v997, %v1004
        %v1007 = vmul.f32 %v765, %v1005
        %v1008 = vmul.f32 %v769, %v1006
        %v1009 = vadd.f32 %v962, %v1007
        %v1010 = vadd.f32 %v963, %v1008
        %v1011 = vld [vmem:[%s5] sm:$0xf]
        %v1012 = vld [vmem:[%s6] sm:$0xf]
        %1014 = vset.pattern.permute.xlu0 0
        %1015 = vperm.xlu0 %1014, %v1012
        %v1016 = vpop.permute.xlu0 %1015
        %v1019 = vsel %vm783, %v1011, 0
        %v1022 = vsel %vm787, %v1009, 0
        %v1025 = vsel %vm787, %v1010, 0
        %1027 = vmatprep.subr.mxu0 %v1025
        %1028 = vmatpush1.msra.mxu0 %v1022
        %1029 = vmatprep.subr.mxu0 0.0
        %1030 = vmatpush1.msra.mxu0 0.0
        %1031 = vmatprep.subr.mxu0 0.0
        %1032 = vmatpush1.msra.mxu0 0.0
        %1033 = vmatprep.subr.mxu0 0.0
        %1034 = vmatpush1.msra.mxu0 0.0
        %1035 = vmatprep.subr.mxu0 0.0
        %1036 = vmatpush1.msra.mxu0 0.0
        %1037 = vmatprep.subr.mxu0 0.0
        %1038 = vmatpush1.msra.mxu0 0.0
        %1039 = vmatprep.subr.mxu0 0.0
        %1040 = vmatpush1.msra.mxu0 0.0
        %1041 = vmatprep.subr.mxu0 0.0
        %1042 = vmatpush1.msra.mxu0 0.0
        %1043 = vmatprep.subr.mxu0 0.0
        %1044 = vmatpush1.msra.mxu0 0.0
        %1045 = vmatprep.subr.mxu0 0.0
        %1046 = vmatpush1.msra.mxu0 0.0
        %1047 = vmatprep.subr.mxu0 0.0
        %1048 = vmatpush1.msra.mxu0 0.0
        %1049 = vmatprep.subr.mxu0 0.0
        %1050 = vmatpush1.msra.mxu0 0.0
        %1051 = vmatprep.subr.mxu0 0.0
        %1052 = vmatpush1.msra.mxu0 0.0
        %1053 = vmatprep.subr.mxu0 0.0
        %1054 = vmatpush1.msra.mxu0 0.0
        %1055 = vmatprep.subr.mxu0 0.0
        %1056 = vmatpush1.msra.mxu0 0.0
        %1057 = vmatprep.subr.mxu0 0.0
        %1058 = vmatpush1.msra.mxu0 0.0
        %1059 = vmatprep.subr.mxu0 0.0
        %1060 = vmatpush1.msra.mxu0 0.0
        %1061 = vmatprep.subr.mxu0 0.0
        %1062 = vmatpush1.msra.mxu0 0.0
        %1063 = vmatprep.subr.mxu0 0.0
        %1064 = vmatpush1.msra.mxu0 0.0
        %1065 = vmatprep.subr.mxu0 0.0
        %1066 = vmatpush1.msra.mxu0 0.0
        %1067 = vmatprep.subr.mxu0 0.0
        %1068 = vmatpush1.msra.mxu0 0.0
        %1069 = vmatprep.subr.mxu0 0.0
        %1070 = vmatpush1.msra.mxu0 0.0
        %1071 = vmatprep.subr.mxu0 0.0
        %1072 = vmatpush1.msra.mxu0 0.0
        %1073 = vmatprep.subr.mxu0 0.0
        %1074 = vmatpush1.msra.mxu0 0.0
        %1075 = vmatprep.subr.mxu0 0.0
        %1076 = vmatpush1.msra.mxu0 0.0
        %1077 = vmatprep.subr.mxu0 0.0
        %1078 = vmatpush1.msra.mxu0 0.0
        %1079 = vmatprep.subr.mxu0 0.0
        %1080 = vmatpush1.msra.mxu0 0.0
        %1081 = vmatprep.subr.mxu0 0.0
        %1082 = vmatpush1.msra.mxu0 0.0
        %1083 = vmatprep.subr.mxu0 0.0
        %1084 = vmatpush1.msra.mxu0 0.0
        %1085 = vmatprep.subr.mxu0 0.0
        %1086 = vmatpush1.msra.mxu0 0.0
        %1087 = vmatprep.subr.mxu0 0.0
        %1088 = vmatpush1.msra.mxu0 0.0
        %1089 = vmatprep.subr.mxu0 0.0
        %1090 = vmatpush1.msra.mxu0 0.0
        %1091 = vmatprep.mubr.f32.mxu0 0.0
        %1092 = vmatmul.mubr.f32.gmra.mrb[0].mxu0 %v1019
        %v1093 = vpop.f32.mrb[0].mxu0
        %v1094 = vadd.f32 %v1016, %v1093
        %v1095 = vpop.f32.mrb[0].mxu0
        %v1096 = vadd.f32 %v1016, %v1095
        %1097 = vdwg.mxu0
        %v1098 = vmax.f32 %v1094, 0.0
        %v1099 = vmax.f32 %v1096, 0.0
        %v1100 = vld [vmem:[%s14] sm:$0xff]
        %v1101 = vld [vmem:[%s14 + $0x8] sm:$0xff]
        %v1102 = vld [vmem:[%s14 + $0x10] sm:$0xff]
        %v1103 = vld [vmem:[%s14 + $0x18] sm:$0xff]
        %v1104 = vld [vmem:[%s14 + $0x20] sm:$0xff]
        %v1105 = vld [vmem:[%s14 + $0x28] sm:$0xff]
        %v1106 = vld [vmem:[%s14 + $0x30] sm:$0xff]
        %v1107 = vld [vmem:[%s14 + $0x38] sm:$0xff]
        %v1108 = vld [vmem:[%s14 + $0x40] sm:$0xff]
        %v1109 = vld [vmem:[%s14 + $0x48] sm:$0xff]
        %v1110 = vld [vmem:[%s14 + $0x50] sm:$0xff]
        %v1111 = vld [vmem:[%s14 + $0x58] sm:$0xff]
        %v1112 = vld [vmem:[%s14 + $0x60] sm:$0xff]
        %v1113 = vld [vmem:[%s14 + $0x68] sm:$0xff]
        %v1114 = vld [vmem:[%s14 + $0x70] sm:$0xff]
        %v1115 = vld [vmem:[%s14 + $0x78] sm:$0xff]
        %v1116 = vld [vmem:[%s14 + $0x80] sm:$0xff]
        %v1117 = vld [vmem:[%s14 + $0x88] sm:$0xff]
        %v1118 = vld [vmem:[%s14 + $0x90] sm:$0xff]
        %v1119 = vld [vmem:[%s14 + $0x98] sm:$0xff]
        %v1120 = vld [vmem:[%s14 + $0xa0] sm:$0xff]
        %v1121 = vld [vmem:[%s14 + $0xa8] sm:$0xff]
        %v1122 = vld [vmem:[%s14 + $0xb0] sm:$0xff]
        %v1123 = vld [vmem:[%s14 + $0xb8] sm:$0xff]
        %v1124 = vld [vmem:[%s14 + $0xc0] sm:$0xff]
        %v1125 = vld [vmem:[%s14 + $0xc8] sm:$0xff]
        %v1126 = vld [vmem:[%s14 + $0xd0] sm:$0xff]
        %v1127 = vld [vmem:[%s14 + $0xd8] sm:$0xff]
        %v1128 = vld [vmem:[%s14 + $0xe0] sm:$0xff]
        %v1129 = vld [vmem:[%s14 + $0xe8] sm:$0xff]
        %v1130 = vld [vmem:[%s14 + $0xf0] sm:$0xff]
        %v1131 = vld [vmem:[%s14 + $0xf8] sm:$0xff]
        %1132 = vmatprep.subr.mxu0 0.0
        %1133 = vmatpush1.msra.mxu0 %v1100
        %1134 = vmatprep.subr.mxu0 0.0
        %1135 = vmatpush1.msra.mxu0 %v1101
        %1136 = vmatprep.subr.mxu0 0.0
        %1137 = vmatpush1.msra.mxu0 %v1102
        %1138 = vmatprep.subr.mxu0 0.0
        %1139 = vmatpush1.msra.mxu0 %v1103
        %1140 = vmatprep.subr.mxu0 0.0
        %1141 = vmatpush1.msra.mxu0 %v1104
        %1142 = vmatprep.subr.mxu0 0.0
        %1143 = vmatpush1.msra.mxu0 %v1105
        %1144 = vmatprep.subr.mxu0 0.0
        %1145 = vmatpush1.msra.mxu0 %v1106
        %1146 = vmatprep.subr.mxu0 0.0
        %1147 = vmatpush1.msra.mxu0 %v1107
        %1148 = vmatprep.subr.mxu0 0.0
        %1149 = vmatpush1.msra.mxu0 %v1108
        %1150 = vmatprep.subr.mxu0 0.0
        %1151 = vmatpush1.msra.mxu0 %v1109
        %1152 = vmatprep.subr.mxu0 0.0
        %1153 = vmatpush1.msra.mxu0 %v1110
        %1154 = vmatprep.subr.mxu0 0.0
        %1155 = vmatpush1.msra.mxu0 %v1111
        %1156 = vmatprep.subr.mxu0 0.0
        %1157 = vmatpush1.msra.mxu0 %v1112
        %1158 = vmatprep.subr.mxu0 0.0
        %1159 = vmatpush1.msra.mxu0 %v1113
        %1160 = vmatprep.subr.mxu0 0.0
        %1161 = vmatpush1.msra.mxu0 %v1114
        %1162 = vmatprep.subr.mxu0 0.0
        %1163 = vmatpush1.msra.mxu0 %v1115
        %1164 = vmatprep.subr.mxu0 0.0
        %1165 = vmatpush1.msra.mxu0 %v1116
        %1166 = vmatprep.subr.mxu0 0.0
        %1167 = vmatpush1.msra.mxu0 %v1117
        %1168 = vmatprep.subr.mxu0 0.0
        %1169 = vmatpush1.msra.mxu0 %v1118
        %1170 = vmatprep.subr.mxu0 0.0
        %1171 = vmatpush1.msra.mxu0 %v1119
        %1172 = vmatprep.subr.mxu0 0.0
        %1173 = vmatpush1.msra.mxu0 %v1120
        %1174 = vmatprep.subr.mxu0 0.0
        %1175 = vmatpush1.msra.mxu0 %v1121
        %1176 = vmatprep.subr.mxu0 0.0
        %1177 = vmatpush1.msra.mxu0 %v1122
        %1178 = vmatprep.subr.mxu0 0.0
        %1179 = vmatpush1.msra.mxu0 %v1123
        %1180 = vmatprep.subr.mxu0 0.0
        %1181 = vmatpush1.msra.mxu0 %v1124
        %1182 = vmatprep.subr.mxu0 0.0
        %1183 = vmatpush1.msra.mxu0 %v1125
        %1184 = vmatprep.subr.mxu0 0.0
        %1185 = vmatpush1.msra.mxu0 %v1126
        %1186 = vmatprep.subr.mxu0 0.0
        %1187 = vmatpush1.msra.mxu0 %v1127
        %1188 = vmatprep.subr.mxu0 0.0
        %1189 = vmatpush1.msra.mxu0 %v1128
        %1190 = vmatprep.subr.mxu0 0.0
        %1191 = vmatpush1.msra.mxu0 %v1129
        %1192 = vmatprep.subr.mxu0 0.0
        %1193 = vmatpush1.msra.mxu0 %v1130
        %1194 = vmatprep.subr.mxu0 0.0
        %1195 = vmatpush1.msra.mxu0 %v1131
        %1196 = vmatprep.mubr.f32.mxu0 %v1099
        %1197 = vmatmul.mubr.f32.gmra.mrb[0].mxu0 %v1098
        %v1198 = vpop.f32.mrb[0].mxu0
        %v1199 = vadd.f32 0.0, %v1198
        %v1200 = vpop.f32.mrb[0].mxu0
        %1201 = vdwg.mxu0
        %v1202 = vld [vmem:[%s15] sm:$0xff]
        %v1203 = vld [vmem:[%s15 + $0x8] sm:$0xff]
        %v1204 = vld [vmem:[%s15 + $0x10] sm:$0xff]
        %v1205 = vld [vmem:[%s15 + $0x18] sm:$0xff]
        %v1206 = vld [vmem:[%s15 + $0x20] sm:$0xff]
        %v1207 = vld [vmem:[%s15 + $0x28] sm:$0xff]
        %v1208 = vld [vmem:[%s15 + $0x30] sm:$0xff]
        %v1209 = vld [vmem:[%s15 + $0x38] sm:$0xff]
        %v1210 = vld [vmem:[%s15 + $0x40] sm:$0xff]
        %v1211 = vld [vmem:[%s15 + $0x48] sm:$0xff]
        %v1212 = vld [vmem:[%s15 + $0x50] sm:$0xff]
        %v1213 = vld [vmem:[%s15 + $0x58] sm:$0xff]
        %v1214 = vld [vmem:[%s15 + $0x60] sm:$0xff]
        %v1215 = vld [vmem:[%s15 + $0x68] sm:$0xff]
        %v1216 = vld [vmem:[%s15 + $0x70] sm:$0xff]
        %v1217 = vld [vmem:[%s15 + $0x78] sm:$0xff]
        %v1218 = vld [vmem:[%s15 + $0x80] sm:$0xff]
        %v1219 = vld [vmem:[%s15 + $0x88] sm:$0xff]
        %v1220 = vld [vmem:[%s15 + $0x90] sm:$0xff]
        %v1221 = vld [vmem:[%s15 + $0x98] sm:$0xff]
        %v1222 = vld [vmem:[%s15 + $0xa0] sm:$0xff]
        %v1223 = vld [vmem:[%s15 + $0xa8] sm:$0xff]
        %v1224 = vld [vmem:[%s15 + $0xb0] sm:$0xff]
        %v1225 = vld [vmem:[%s15 + $0xb8] sm:$0xff]
        %v1226 = vld [vmem:[%s15 + $0xc0] sm:$0xff]
        %v1227 = vld [vmem:[%s15 + $0xc8] sm:$0xff]
        %v1228 = vld [vmem:[%s15 + $0xd0] sm:$0xff]
        %v1229 = vld [vmem:[%s15 + $0xd8] sm:$0xff]
        %v1230 = vld [vmem:[%s15 + $0xe0] sm:$0xff]
        %v1231 = vld [vmem:[%s15 + $0xe8] sm:$0xff]
        %v1232 = vld [vmem:[%s15 + $0xf0] sm:$0xff]
        %v1233 = vld [vmem:[%s15 + $0xf8] sm:$0xff]
        %1234 = vmatprep.subr.mxu0 0.0
        %1235 = vmatpush1.msra.mxu0 %v1202
        %1236 = vmatprep.subr.mxu0 0.0
        %1237 = vmatpush1.msra.mxu0 %v1203
        %1238 = vmatprep.subr.mxu0 0.0
        %1239 = vmatpush1.msra.mxu0 %v1204
        %1240 = vmatprep.subr.mxu0 0.0
        %1241 = vmatpush1.msra.mxu0 %v1205
        %1242 = vmatprep.subr.mxu0 0.0
        %1243 = vmatpush1.msra.mxu0 %v1206
        %1244 = vmatprep.subr.mxu0 0.0
        %1245 = vmatpush1.msra.mxu0 %v1207
        %1246 = vmatprep.subr.mxu0 0.0
        %1247 = vmatpush1.msra.mxu0 %v1208
        %1248 = vmatprep.subr.mxu0 0.0
        %1249 = vmatpush1.msra.mxu0 %v1209
        %1250 = vmatprep.subr.mxu0 0.0
        %1251 = vmatpush1.msra.mxu0 %v1210
        %1252 = vmatprep.subr.mxu0 0.0
        %1253 = vmatpush1.msra.mxu0 %v1211
        %1254 = vmatprep.subr.mxu0 0.0
        %1255 = vmatpush1.msra.mxu0 %v1212
        %1256 = vmatprep.subr.mxu0 0.0
        %1257 = vmatpush1.msra.mxu0 %v1213
        %1258 = vmatprep.subr.mxu0 0.0
        %1259 = vmatpush1.msra.mxu0 %v1214
        %1260 = vmatprep.subr.mxu0 0.0
        %1261 = vmatpush1.msra.mxu0 %v1215
        %1262 = vmatprep.subr.mxu0 0.0
        %1263 = vmatpush1.msra.mxu0 %v1216
        %1264 = vmatprep.subr.mxu0 0.0
        %1265 = vmatpush1.msra.mxu0 %v1217
        %1266 = vmatprep.subr.mxu0 0.0
        %1267 = vmatpush1.msra.mxu0 %v1218
        %1268 = vmatprep.subr.mxu0 0.0
        %1269 = vmatpush1.msra.mxu0 %v1219
        %1270 = vmatprep.subr.mxu0 0.0
        %1271 = vmatpush1.msra.mxu0 %v1220
        %1272 = vmatprep.subr.mxu0 0.0
        %1273 = vmatpush1.msra.mxu0 %v1221
        %1274 = vmatprep.subr.mxu0 0.0
        %1275 = vmatpush1.msra.mxu0 %v1222
        %1276 = vmatprep.subr.mxu0 0.0
        %1277 = vmatpush1.msra.mxu0 %v1223
        %1278 = vmatprep.subr.mxu0 0.0
        %1279 = vmatpush1.msra.mxu0 %v1224
        %1280 = vmatprep.subr.mxu0 0.0
        %1281 = vmatpush1.msra.mxu0 %v1225
        %1282 = vmatprep.subr.mxu0 0.0
        %1283 = vmatpush1.msra.mxu0 %v1226
        %1284 = vmatprep.subr.mxu0 0.0
        %1285 = vmatpush1.msra.mxu0 %v1227
        %1286 = vmatprep.subr.mxu0 0.0
        %1287 = vmatpush1.msra.mxu0 %v1228
        %1288 = vmatprep.subr.mxu0 0.0
        %1289 = vmatpush1.msra.mxu0 %v1229
        %1290 = vmatprep.subr.mxu0 0.0
        %1291 = vmatpush1.msra.mxu0 %v1230
        %1292 = vmatprep.subr.mxu0 0.0
        %1293 = vmatpush1.msra.mxu0 %v1231
        %1294 = vmatprep.subr.mxu0 0.0
        %1295 = vmatpush1.msra.mxu0 %v1232
        %1296 = vmatprep.subr.mxu0 0.0
        %1297 = vmatpush1.msra.mxu0 %v1233
        %1298 = vmatprep.mubr.f32.mxu0 %v1099
        %1299 = vmatmul.mubr.f32.gmra.mrb[0].mxu0 %v1098
        %v1300 = vpop.f32.mrb[0].mxu0
        %v1301 = vadd.f32 0.0, %v1300
        %v1302 = vpop.f32.mrb[0].mxu0
        %1303 = vdwg.mxu0
        %v1304 = vld [vmem:[%s7] sm:$0xff]
        %v1305 = vld [vmem:[%s8] sm:$0xff]
        %1307 = vset.pattern.permute.xlu0 0
        %1308 = vperm.xlu0 %1307, %v1305
        %v1309 = vpop.permute.xlu0 %1308
        %v1312 = vsel %vm783, %v1304, 0
        %v1315 = vsel %vm787, %v1199, 0
        %1317 = vmatprep.subr.mxu0 0.0
        %1318 = vmatpush1.msra.mxu0 %v1315
        %1319 = vmatprep.subr.mxu0 0.0
        %1320 = vmatpush1.msra.mxu0 0.0
        %1321 = vmatprep.subr.mxu0 0.0
        %1322 = vmatpush1.msra.mxu0 0.0
        %1323 = vmatprep.subr.mxu0 0.0
        %1324 = vmatpush1.msra.mxu0 0.0
        %1325 = vmatprep.subr.mxu0 0.0
        %1326 = vmatpush1.msra.mxu0 0.0
        %1327 = vmatprep.subr.mxu0 0.0
        %1328 = vmatpush1.msra.mxu0 0.0
        %1329 = vmatprep.subr.mxu0 0.0
        %1330 = vmatpush1.msra.mxu0 0.0
        %1331 = vmatprep.subr.mxu0 0.0
        %1332 = vmatpush1.msra.mxu0 0.0
        %1333 = vmatprep.subr.mxu0 0.0
        %1334 = vmatpush1.msra.mxu0 0.0
        %1335 = vmatprep.subr.mxu0 0.0
        %1336 = vmatpush1.msra.mxu0 0.0
        %1337 = vmatprep.subr.mxu0 0.0
        %1338 = vmatpush1.msra.mxu0 0.0
        %1339 = vmatprep.subr.mxu0 0.0
        %1340 = vmatpush1.msra.mxu0 0.0
        %1341 = vmatprep.subr.mxu0 0.0
        %1342 = vmatpush1.msra.mxu0 0.0
        %1343 = vmatprep.subr.mxu0 0.0
        %1344 = vmatpush1.msra.mxu0 0.0
        %1345 = vmatprep.subr.mxu0 0.0
        %1346 = vmatpush1.msra.mxu0 0.0
        %1347 = vmatprep.subr.mxu0 0.0
        %1348 = vmatpush1.msra.mxu0 0.0
        %1349 = vmatprep.subr.mxu0 0.0
        %1350 = vmatpush1.msra.mxu0 0.0
        %1351 = vmatprep.subr.mxu0 0.0
        %1352 = vmatpush1.msra.mxu0 0.0
        %1353 = vmatprep.subr.mxu0 0.0
        %1354 = vmatpush1.msra.mxu0 0.0
        %1355 = vmatprep.subr.mxu0 0.0
        %1356 = vmatpush1.msra.mxu0 0.0
        %1357 = vmatprep.subr.mxu0 0.0
        %1358 = vmatpush1.msra.mxu0 0.0
        %1359 = vmatprep.subr.mxu0 0.0
        %1360 = vmatpush1.msra.mxu0 0.0
        %1361 = vmatprep.subr.mxu0 0.0
        %1362 = vmatpush1.msra.mxu0 0.0
        %1363 = vmatprep.subr.mxu0 0.0
        %1364 = vmatpush1.msra.mxu0 0.0
        %1365 = vmatprep.subr.mxu0 0.0
        %1366 = vmatpush1.msra.mxu0 0.0
        %1367 = vmatprep.subr.mxu0 0.0
        %1368 = vmatpush1.msra.mxu0 0.0
        %1369 = vmatprep.subr.mxu0 0.0
        %1370 = vmatpush1.msra.mxu0 0.0
        %1371 = vmatprep.subr.mxu0 0.0
        %1372 = vmatpush1.msra.mxu0 0.0
        %1373 = vmatprep.subr.mxu0 0.0
        %1374 = vmatpush1.msra.mxu0 0.0
        %1375 = vmatprep.subr.mxu0 0.0
        %1376 = vmatpush1.msra.mxu0 0.0
        %1377 = vmatprep.subr.mxu0 0.0
        %1378 = vmatpush1.msra.mxu0 0.0
        %1379 = vmatprep.subr.mxu0 0.0
        %1380 = vmatpush1.msra.mxu0 0.0
        %1381 = vmatprep.mubr.f32.mxu0 0.0
        %1382 = vmatmul.mubr.f32.gmra.mrb[0].mxu0 %v1312
        %v1383 = vpop.f32.mrb[0].mxu0
        %v1384 = vadd.f32 %v1309, %v1383
        %v1385 = vpop.f32.mrb[0].mxu0
        %1386 = vdwg.mxu0
        %v1387 = vadd.f32 %v1384, 3.0
        %v1388 = vmax.f32 %v1387, 0.0
        %v1389 = vmin.f32 %v1388, 6.0
        %v1390 = vmul.f32 %v1389, 0.16666667
        %v1391 = vmul.f32 %v1384, %v1390
        %v1393 = vsel %vm787, %v1301, 0
        %1395 = vmatprep.subr.mxu0 0.0
        %1396 = vmatpush1.msra.mxu0 %v1393
        %1397 = vmatprep.subr.mxu0 0.0
        %1398 = vmatpush1.msra.mxu0 0.0
        %1399 = vmatprep.subr.mxu0 0.0
        %1400 = vmatpush1.msra.mxu0 0.0
        %1401 = vmatprep.subr.mxu0 0.0
        %1402 = vmatpush1.msra.mxu0 0.0
        %1403 = vmatprep.subr.mxu0 0.0
        %1404 = vmatpush1.msra.mxu0 0.0
        %1405 = vmatprep.subr.mxu0 0.0
        %1406 = vmatpush1.msra.mxu0 0.0
        %1407 = vmatprep.subr.mxu0 0.0
        %1408 = vmatpush1.msra.mxu0 0.0
        %1409 = vmatprep.subr.mxu0 0.0
        %1410 = vmatpush1.msra.mxu0 0.0
        %1411 = vmatprep.subr.mxu0 0.0
        %1412 = vmatpush1.msra.mxu0 0.0
        %1413 = vmatprep.subr.mxu0 0.0
        %1414 = vmatpush1.msra.mxu0 0.0
        %1415 = vmatprep.subr.mxu0 0.0
        %1416 = vmatpush1.msra.mxu0 0.0
        %1417 = vmatprep.subr.mxu0 0.0
        %1418 = vmatpush1.msra.mxu0 0.0
        %1419 = vmatprep.subr.mxu0 0.0
        %1420 = vmatpush1.msra.mxu0 0.0
        %1421 = vmatprep.subr.mxu0 0.0
        %1422 = vmatpush1.msra.mxu0 0.0
        %1423 = vmatprep.subr.mxu0 0.0
        %1424 = vmatpush1.msra.mxu0 0.0
        %1425 = vmatprep.subr.mxu0 0.0
        %1426 = vmatpush1.msra.mxu0 0.0
        %1427 = vmatprep.subr.mxu0 0.0
        %1428 = vmatpush1.msra.mxu0 0.0
        %1429 = vmatprep.subr.mxu0 0.0
        %1430 = vmatpush1.msra.mxu0 0.0
        %1431 = vmatprep.subr.mxu0 0.0
        %1432 = vmatpush1.msra.mxu0 0.0
        %1433 = vmatprep.subr.mxu0 0.0
        %1434 = vmatpush1.msra.mxu0 0.0
        %1435 = vmatprep.subr.mxu0 0.0
        %1436 = vmatpush1.msra.mxu0 0.0
        %1437 = vmatprep.subr.mxu0 0.0
        %1438 = vmatpush1.msra.mxu0 0.0
        %1439 = vmatprep.subr.mxu0 0.0
        %1440 = vmatpush1.msra.mxu0 0.0
        %1441 = vmatprep.subr.mxu0 0.0
        %1442 = vmatpush1.msra.mxu0 0.0
        %1443 = vmatprep.subr.mxu0 0.0
        %1444 = vmatpush1.msra.mxu0 0.0
        %1445 = vmatprep.subr.mxu0 0.0
        %1446 = vmatpush1.msra.mxu0 0.0
        %1447 = vmatprep.subr.mxu0 0.0
        %1448 = vmatpush1.msra.mxu0 0.0
        %1449 = vmatprep.subr.mxu0 0.0
        %1450 = vmatpush1.msra.mxu0 0.0
        %1451 = vmatprep.subr.mxu0 0.0
        %1452 = vmatpush1.msra.mxu0 0.0
        %1453 = vmatprep.subr.mxu0 0.0
        %1454 = vmatpush1.msra.mxu0 0.0
        %1455 = vmatprep.subr.mxu0 0.0
        %1456 = vmatpush1.msra.mxu0 0.0
        %1457 = vmatprep.subr.mxu0 0.0
        %1458 = vmatpush1.msra.mxu0 0.0
        %1459 = vmatprep.mubr.f32.mxu0 0.0
        %1460 = vmatmul.mubr.f32.gmra.mrb[0].mxu0 %v1312
        %v1461 = vpop.f32.mrb[0].mxu0
        %v1462 = vadd.f32 %v1309, %v1461
        %v1463 = vpop.f32.mrb[0].mxu0
        %1464 = vdwg.mxu0
        %v1465 = vadd.f32 %v1462, 3.0
        %v1466 = vmax.f32 %v1465, 0.0
        %v1467 = vmin.f32 %v1466, 6.0
        %v1468 = vmul.f32 %v1467, 0.16666667
        %v1469 = vmul.f32 %v1462, %v1468
        %v1470 = vld [vmem:[%s9] sm:$0xf]
        %v1471 = vld [vmem:[%s10] sm:$0xf]
        %1473 = vset.pattern.permute.xlu0 0
        %1474 = vperm.xlu0 %1473, %v1471
        %v1475 = vpop.permute.xlu0 %1474
        %vm1477 = vcmask 64512
        %v1479 = vsel %vm1477, %v1470, 0
        %1481 = vmatprep.subr.mxu0 0.0
        %1482 = vmatpush1.msra.mxu0 %v1391
        %1483 = vmatprep.subr.mxu0 0.0
        %1484 = vmatpush1.msra.mxu0 0.0
        %1485 = vmatprep.subr.mxu0 0.0
        %1486 = vmatpush1.msra.mxu0 0.0
        %1487 = vmatprep.subr.mxu0 0.0
        %1488 = vmatpush1.msra.mxu0 0.0
        %1489 = vmatprep.subr.mxu0 0.0
        %1490 = vmatpush1.msra.mxu0 0.0
        %1491 = vmatprep.subr.mxu0 0.0
        %1492 = vmatpush1.msra.mxu0 0.0
        %1493 = vmatprep.subr.mxu0 0.0
        %1494 = vmatpush1.msra.mxu0 0.0
        %1495 = vmatprep.subr.mxu0 0.0
        %1496 = vmatpush1.msra.mxu0 0.0
        %1497 = vmatprep.subr.mxu0 0.0
        %1498 = vmatpush1.msra.mxu0 0.0
        %1499 = vmatprep.subr.mxu0 0.0
        %1500 = vmatpush1.msra.mxu0 0.0
        %1501 = vmatprep.subr.mxu0 0.0
        %1502 = vmatpush1.msra.mxu0 0.0
        %1503 = vmatprep.subr.mxu0 0.0
        %1504 = vmatpush1.msra.mxu0 0.0
        %1505 = vmatprep.subr.mxu0 0.0
        %1506 = vmatpush1.msra.mxu0 0.0
        %1507 = vmatprep.subr.mxu0 0.0
        %1508 = vmatpush1.msra.mxu0 0.0
        %1509 = vmatprep.subr.mxu0 0.0
        %1510 = vmatpush1.msra.mxu0 0.0
        %1511 = vmatprep.subr.mxu0 0.0
        %1512 = vmatpush1.msra.mxu0 0.0
        %1513 = vmatprep.subr.mxu0 0.0
        %1514 = vmatpush1.msra.mxu0 0.0
        %1515 = vmatprep.subr.mxu0 0.0
        %1516 = vmatpush1.msra.mxu0 0.0
        %1517 = vmatprep.subr.mxu0 0.0
        %1518 = vmatpush1.msra.mxu0 0.0
        %1519 = vmatprep.subr.mxu0 0.0
        %1520 = vmatpush1.msra.mxu0 0.0
        %1521 = vmatprep.subr.mxu0 0.0
        %1522 = vmatpush1.msra.mxu0 0.0
        %1523 = vmatprep.subr.mxu0 0.0
        %1524 = vmatpush1.msra.mxu0 0.0
        %1525 = vmatprep.subr.mxu0 0.0
        %1526 = vmatpush1.msra.mxu0 0.0
        %1527 = vmatprep.subr.mxu0 0.0
        %1528 = vmatpush1.msra.mxu0 0.0
        %1529 = vmatprep.subr.mxu0 0.0
        %1530 = vmatpush1.msra.mxu0 0.0
        %1531 = vmatprep.subr.mxu0 0.0
        %1532 = vmatpush1.msra.mxu0 0.0
        %1533 = vmatprep.subr.mxu0 0.0
        %1534 = vmatpush1.msra.mxu0 0.0
        %1535 = vmatprep.subr.mxu0 0.0
        %1536 = vmatpush1.msra.mxu0 0.0
        %1537 = vmatprep.subr.mxu0 0.0
        %1538 = vmatpush1.msra.mxu0 0.0
        %1539 = vmatprep.subr.mxu0 0.0
        %1540 = vmatpush1.msra.mxu0 0.0
        %1541 = vmatprep.subr.mxu0 0.0
        %1542 = vmatpush1.msra.mxu0 0.0
        %1543 = vmatprep.subr.mxu0 0.0
        %1544 = vmatpush1.msra.mxu0 0.0
        %1545 = vmatprep.mubr.f32.mxu0 0.0
        %1546 = vmatmul.mubr.f32.gmra.mrb[0].mxu0 %v1479
        %v1547 = vpop.f32.mrb[0].mxu0
        %v1548 = vadd.f32 %v1475, %v1547
        %v1549 = vpop.f32.mrb[0].mxu0
        %1550 = vdwg.mxu0
        %v1551 = vxor.u32 %v1548, 2147483648
        %v1552 = vmul.f32 %v1551, 1.442695
        %v1553 = vpow.pop %v1552
        %v1554 = vadd.f32 %v1553, 1.0
        %v1555 = vrcp.pop %v1554
        %v1556 = vmul.f32 1.0, %v1555
        %v1557 = vld [vmem:[%s11] sm:$0xf]
        %v1558 = vld [vmem:[%s12] sm:$0xf]
        %1560 = vset.pattern.permute.xlu0 0
        %1561 = vperm.xlu0 %1560, %v1558
        %v1562 = vpop.permute.xlu0 %1561
        %v1565 = vsel %vm1477, %v1557, 0
        %1567 = vmatprep.subr.mxu0 0.0
        %1568 = vmatpush1.msra.mxu0 %v1469
        %1569 = vmatprep.subr.mxu0 0.0
        %1570 = vmatpush1.msra.mxu0 0.0
        %1571 = vmatprep.subr.mxu0 0.0
        %1572 = vmatpush1.msra.mxu0 0.0
        %1573 = vmatprep.subr.mxu0 0.0
        %1574 = vmatpush1.msra.mxu0 0.0
        %1575 = vmatprep.subr.mxu0 0.0
        %1576 = vmatpush1.msra.mxu0 0.0
        %1577 = vmatprep.subr.mxu0 0.0
        %1578 = vmatpush1.msra.mxu0 0.0
        %1579 = vmatprep.subr.mxu0 0.0
        %1580 = vmatpush1.msra.mxu0 0.0
        %1581 = vmatprep.subr.mxu0 0.0
        %1582 = vmatpush1.msra.mxu0 0.0
        %1583 = vmatprep.subr.mxu0 0.0
        %1584 = vmatpush1.msra.mxu0 0.0
        %1585 = vmatprep.subr.mxu0 0.0
        %1586 = vmatpush1.msra.mxu0 0.0
        %1587 = vmatprep.subr.mxu0 0.0
        %1588 = vmatpush1.msra.mxu0 0.0
        %1589 = vmatprep.subr.mxu0 0.0
        %1590 = vmatpush1.msra.mxu0 0.0
        %1591 = vmatprep.subr.mxu0 0.0
        %1592 = vmatpush1.msra.mxu0 0.0
        %1593 = vmatprep.subr.mxu0 0.0
        %1594 = vmatpush1.msra.mxu0 0.0
        %1595 = vmatprep.subr.mxu0 0.0
        %1596 = vmatpush1.msra.mxu0 0.0
        %1597 = vmatprep.subr.mxu0 0.0
        %1598 = vmatpush1.msra.mxu0 0.0
        %1599 = vmatprep.subr.mxu0 0.0
        %1600 = vmatpush1.msra.mxu0 0.0
        %1601 = vmatprep.subr.mxu0 0.0
        %1602 = vmatpush1.msra.mxu0 0.0
        %1603 = vmatprep.subr.mxu0 0.0
        %1604 = vmatpush1.msra.mxu0 0.0
        %1605 = vmatprep.subr.mxu0 0.0
        %1606 = vmatpush1.msra.mxu0 0.0
        %1607 = vmatprep.subr.mxu0 0.0
        %1608 = vmatpush1.msra.mxu0 0.0
        %1609 = vmatprep.subr.mxu0 0.0
        %1610 = vmatpush1.msra.mxu0 0.0
        %1611 = vmatprep.subr.mxu0 0.0
        %1612 = vmatpush1.msra.mxu0 0.0
        %1613 = vmatprep.subr.mxu0 0.0
        %1614 = vmatpush1.msra.mxu0 0.0
        %1615 = vmatprep.subr.mxu0 0.0
        %1616 = vmatpush1.msra.mxu0 0.0
        %1617 = vmatprep.subr.mxu0 0.0
        %1618 = vmatpush1.msra.mxu0 0.0
        %1619 = vmatprep.subr.mxu0 0.0
        %1620 = vmatpush1.msra.mxu0 0.0
        %1621 = vmatprep.subr.mxu0 0.0
        %1622 = vmatpush1.msra.mxu0 0.0
        %1623 = vmatprep.subr.mxu0 0.0
        %1624 = vmatpush1.msra.mxu0 0.0
        %1625 = vmatprep.subr.mxu0 0.0
        %1626 = vmatpush1.msra.mxu0 0.0
        %1627 = vmatprep.subr.mxu0 0.0
        %1628 = vmatpush1.msra.mxu0 0.0
        %1629 = vmatprep.subr.mxu0 0.0
        %1630 = vmatpush1.msra.mxu0 0.0
        %1631 = vmatprep.mubr.f32.mxu0 0.0
        %1632 = vmatmul.mubr.f32.gmra.mrb[0].mxu0 %v1565
        %v1633 = vpop.f32.mrb[0].mxu0
        %v1634 = vadd.f32 %v1562, %v1633
        %v1635 = vpop.f32.mrb[0].mxu0
        %1636 = vdwg.mxu0
        %v1637 = vxor.u32 %v1634, 2147483648
        %v1638 = vmul.f32 %v1637, 1.442695
        %v1639 = vpow.pop %v1638
        %v1640 = vadd.f32 %v1639, 1.0
        %v1641 = vrcp.pop %v1640
        %v1642 = vmul.f32 1.0, %v1641
        %v1643 = vld [vmem:[%s16] sm:$0xff]
        %v1644 = vld [vmem:[%s16 + $0x8] sm:$0xff]
        %v1645 = vld [vmem:[%s16 + $0x10] sm:$0xff]
        %v1646 = vld [vmem:[%s16 + $0x18] sm:$0xff]
        %vm1647 = vcmask 130048
        %v1649 = vsel %vm1647, %v1556, 0
        %1651 = vmatprep.subr.mxu0 %v1644
        %1652 = vmatpush1.msra.mxu0 %v1643
        %1653 = vmatprep.subr.mxu0 %v1646
        %1654 = vmatpush1.msra.mxu0 %v1645
        %1655 = vmatprep.subr.mxu0 0.0
        %1656 = vmatpush1.msra.mxu0 0.0
        %1657 = vmatprep.subr.mxu0 0.0
        %1658 = vmatpush1.msra.mxu0 0.0
        %1659 = vmatprep.subr.mxu0 0.0
        %1660 = vmatpush1.msra.mxu0 0.0
        %1661 = vmatprep.subr.mxu0 0.0
        %1662 = vmatpush1.msra.mxu0 0.0
        %1663 = vmatprep.subr.mxu0 0.0
        %1664 = vmatpush1.msra.mxu0 0.0
        %1665 = vmatprep.subr.mxu0 0.0
        %1666 = vmatpush1.msra.mxu0 0.0
        %1667 = vmatprep.subr.mxu0 0.0
        %1668 = vmatpush1.msra.mxu0 0.0
        %1669 = vmatprep.subr.mxu0 0.0
        %1670 = vmatpush1.msra.mxu0 0.0
        %1671 = vmatprep.subr.mxu0 0.0
        %1672 = vmatpush1.msra.mxu0 0.0
        %1673 = vmatprep.subr.mxu0 0.0
        %1674 = vmatpush1.msra.mxu0 0.0
        %1675 = vmatprep.subr.mxu0 0.0
        %1676 = vmatpush1.msra.mxu0 0.0
        %1677 = vmatprep.subr.mxu0 0.0
        %1678 = vmatpush1.msra.mxu0 0.0
        %1679 = vmatprep.subr.mxu0 0.0
        %1680 = vmatpush1.msra.mxu0 0.0
        %1681 = vmatprep.subr.mxu0 0.0
        %1682 = vmatpush1.msra.mxu0 0.0
        %1683 = vmatprep.subr.mxu0 0.0
        %1684 = vmatpush1.msra.mxu0 0.0
        %1685 = vmatprep.subr.mxu0 0.0
        %1686 = vmatpush1.msra.mxu0 0.0
        %1687 = vmatprep.subr.mxu0 0.0
        %1688 = vmatpush1.msra.mxu0 0.0
        %1689 = vmatprep.subr.mxu0 0.0
        %1690 = vmatpush1.msra.mxu0 0.0
        %1691 = vmatprep.subr.mxu0 0.0
        %1692 = vmatpush1.msra.mxu0 0.0
        %1693 = vmatprep.subr.mxu0 0.0
        %1694 = vmatpush1.msra.mxu0 0.0
        %1695 = vmatprep.subr.mxu0 0.0
        %1696 = vmatpush1.msra.mxu0 0.0
        %1697 = vmatprep.subr.mxu0 0.0
        %1698 = vmatpush1.msra.mxu0 0.0
        %1699 = vmatprep.subr.mxu0 0.0
        %1700 = vmatpush1.msra.mxu0 0.0
        %1701 = vmatprep.subr.mxu0 0.0
        %1702 = vmatpush1.msra.mxu0 0.0
        %1703 = vmatprep.subr.mxu0 0.0
        %1704 = vmatpush1.msra.mxu0 0.0
        %1705 = vmatprep.subr.mxu0 0.0
        %1706 = vmatpush1.msra.mxu0 0.0
        %1707 = vmatprep.subr.mxu0 0.0
        %1708 = vmatpush1.msra.mxu0 0.0
        %1709 = vmatprep.subr.mxu0 0.0
        %1710 = vmatpush1.msra.mxu0 0.0
        %1711 = vmatprep.subr.mxu0 0.0
        %1712 = vmatpush1.msra.mxu0 0.0
        %1713 = vmatprep.subr.mxu0 0.0
        %1714 = vmatpush1.msra.mxu0 0.0
        %1715 = vmatprep.mubr.f32.mxu0 0.0
        %1716 = vmatmul.mubr.f32.gmra.mrb[0].mxu0 %v1649
        %v1717 = vpop.f32.mrb[0].mxu0
        %v1718 = vadd.f32 0.0, %v1717
        %v1719 = vpop.f32.mrb[0].mxu0
        %v1720 = vadd.f32 0.0, %v1719
        %1721 = vdwg.mxu0
        %v1722 = vld [vmem:[%s17] sm:$0xff]
        %v1723 = vld [vmem:[%s17 + $0x8] sm:$0xff]
        %v1724 = vld [vmem:[%s17 + $0x10] sm:$0xff]
        %v1725 = vld [vmem:[%s17 + $0x18] sm:$0xff]
        %v1727 = vsel %vm1647, %v1642, 0
        %1729 = vmatprep.subr.mxu0 %v1723
        %1730 = vmatpush1.msra.mxu0 %v1722
        %1731 = vmatprep.subr.mxu0 %v1725
        %1732 = vmatpush1.msra.mxu0 %v1724
        %1733 = vmatprep.subr.mxu0 0.0
        %1734 = vmatpush1.msra.mxu0 0.0
        %1735 = vmatprep.subr.mxu0 0.0
        %1736 = vmatpush1.msra.mxu0 0.0
        %1737 = vmatprep.subr.mxu0 0.0
        %1738 = vmatpush1.msra.mxu0 0.0
        %1739 = vmatprep.subr.mxu0 0.0
        %1740 = vmatpush1.msra.mxu0 0.0
        %1741 = vmatprep.subr.mxu0 0.0
        %1742 = vmatpush1.msra.mxu0 0.0
        %1743 = vmatprep.subr.mxu0 0.0
        %1744 = vmatpush1.msra.mxu0 0.0
        %1745 = vmatprep.subr.mxu0 0.0
        %1746 = vmatpush1.msra.mxu0 0.0
        %1747 = vmatprep.subr.mxu0 0.0
        %1748 = vmatpush1.msra.mxu0 0.0
        %1749 = vmatprep.subr.mxu0 0.0
        %1750 = vmatpush1.msra.mxu0 0.0
        %1751 = vmatprep.subr.mxu0 0.0
        %1752 = vmatpush1.msra.mxu0 0.0
        %1753 = vmatprep.subr.mxu0 0.0
        %1754 = vmatpush1.msra.mxu0 0.0
        %1755 = vmatprep.subr.mxu0 0.0
        %1756 = vmatpush1.msra.mxu0 0.0
        %1757 = vmatprep.subr.mxu0 0.0
        %1758 = vmatpush1.msra.mxu0 0.0
        %1759 = vmatprep.subr.mxu0 0.0
        %1760 = vmatpush1.msra.mxu0 0.0
        %1761 = vmatprep.subr.mxu0 0.0
        %1762 = vmatpush1.msra.mxu0 0.0
        %1763 = vmatprep.subr.mxu0 0.0
        %1764 = vmatpush1.msra.mxu0 0.0
        %1765 = vmatprep.subr.mxu0 0.0
        %1766 = vmatpush1.msra.mxu0 0.0
        %1767 = vmatprep.subr.mxu0 0.0
        %1768 = vmatpush1.msra.mxu0 0.0
        %1769 = vmatprep.subr.mxu0 0.0
        %1770 = vmatpush1.msra.mxu0 0.0
        %1771 = vmatprep.subr.mxu0 0.0
        %1772 = vmatpush1.msra.mxu0 0.0
        %1773 = vmatprep.subr.mxu0 0.0
        %1774 = vmatpush1.msra.mxu0 0.0
        %1775 = vmatprep.subr.mxu0 0.0
        %1776 = vmatpush1.msra.mxu0 0.0
        %1777 = vmatprep.subr.mxu0 0.0
        %1778 = vmatpush1.msra.mxu0 0.0
        %1779 = vmatprep.subr.mxu0 0.0
        %1780 = vmatpush1.msra.mxu0 0.0
        %1781 = vmatprep.subr.mxu0 0.0
        %1782 = vmatpush1.msra.mxu0 0.0
        %1783 = vmatprep.subr.mxu0 0.0
        %1784 = vmatpush1.msra.mxu0 0.0
        %1785 = vmatprep.subr.mxu0 0.0
        %1786 = vmatpush1.msra.mxu0 0.0
        %1787 = vmatprep.subr.mxu0 0.0
        %1788 = vmatpush1.msra.mxu0 0.0
        %1789 = vmatprep.subr.mxu0 0.0
        %1790 = vmatpush1.msra.mxu0 0.0
        %1791 = vmatprep.subr.mxu0 0.0
        %1792 = vmatpush1.msra.mxu0 0.0
        %1793 = vmatprep.mubr.f32.mxu0 0.0
        %1794 = vmatmul.mubr.f32.gmra.mrb[0].mxu0 %v1727
        %v1795 = vpop.f32.mrb[0].mxu0
        %v1796 = vadd.f32 0.0, %v1795
        %v1797 = vpop.f32.mrb[0].mxu0
        %v1798 = vadd.f32 0.0, %v1797
        %1799 = vdwg.mxu0
        %v1800 = vmul.f32 %v1718, %v1796
        %v1801 = vmul.f32 %v1720, %v1798
        %v1802 = vmul.f32 %v1098, %v1800
        %v1803 = vmul.f32 %v1099, %v1801
        %v1806 = vcombine.low %v1802, %v1803
        %1808 = vst [vmem:[%s568] sm:$0xff] %v1806
        %s1809 = sand.u32 %s423, 1
        %s1810 = scalar_lea.sflag [#allocation3], %s1809
        %s1811 = sand.u32 %s423, 1
        %s1812 = smul.addr %s1811, 8
        %s1813 = scalar_lea.vmem [#allocation2], %s1812
        // Predicated region
        $region93: #{tpu_custom_call.1} parent=91 // pred_check
          %p1814 = pneg %p433
        $region94: #{tpu_custom_call.1} parent=91 // pred_check_branch
          %1816 = sbr.rel (%p1814) target = $region96
        $region95: #{tpu_custom_call.1} parent=91 // pred_region
          %s1818 = ssub.s32 128, 128
          %1819 = vsyncadd %s1810, %s1818
          %s1820 = smul.addr %s32, 2
          %s1821 = smul.addr %s1820, 64
          %s1822 = scalar_lea.hbm %s18, %s1821
          %s1824 = sshll.u32 %s1813, 4
          %s1825 = int_to_ptr.vmem [resolvable:$true] %s1824
          %1827 = dma.vmem_to_hbm [thread:$0]  %s1825, 128, %s1822, %s1810
        $region96: #{tpu_custom_call.1} parent=91 // pred_fallthru
          _
      $region92: #{tpu_custom_call.1} parent=5 // pred_fallthru
        _
      %p1828 = scmp.le.s32.totalorder 2, %s27
      // Predicated region
      $region97: #{tpu_custom_call.1} parent=5 // pred_check
        %p1829 = pneg %p1828
      $region98: #{tpu_custom_call.1} parent=5 // pred_check_branch
        %1831 = sbr.rel (%p1829) target = $region100
      $region99: #{tpu_custom_call.1} parent=5 // pred_region
        %s1832 = ssub.s32 %s27, 2
        // Predicated region
        $region101: #{tpu_custom_call.1} parent=99 // pred_check
          %p1833 = pneg %p439
        $region102: #{tpu_custom_call.1} parent=99 // pred_check_branch
          %1835 = sbr.rel (%p1833) target = $region104
        $region103: #{tpu_custom_call.1} parent=99 // pred_region
          %s1836 = sand.u32 %s424, 1
          %s1837 = scalar_lea.sflag [#allocation3], %s1836
          %s1838 = sand.u32 %s424, 1
          %s1839 = smul.addr %s1838, 8
          %s1840 = scalar_lea.vmem [#allocation2], %s1839
          %1841 = dma.done %s1837, 128
        $region104: #{tpu_custom_call.1} parent=99 // pred_fallthru
          _
      $region100: #{tpu_custom_call.1} parent=5 // pred_fallthru
        _
    $region6: #{tpu_custom_call.1} parent=1 // loop_footer
      %s31 = sadd.s32 1, %s27
    $region7: #{tpu_custom_call.1} parent=1 // loop_footer_branch
      %26 = sbr.rel target = $region3
    $region8: #{tpu_custom_call.1} parent=1 // loop_exit
      _
    %1842 = vsyncpa [#allocation3], 1
    %s1843 = scalar_lea.sflag [#allocation3], 1
    %1844 = vsyncpa %s1843, 1

</llo_original>
